<compile_context>
chip_gen: v7x
topology: tpu7x:2x2x1
jax: 0.10.0
libtpu: 0.0.40
codegen_flags: <defaults>
</compile_context>

<pallas_src>
import functools

import jax
import jax.numpy as jnp
from jax.experimental import pallas as pl
from jax.experimental.pallas import tpu as pltpu

_LANE = 128
_SUBLANE = 8
_NEG_BIG = -1.0e30  # finite "minus infinity" used only for in-kernel masking


def _round_up(x, m):
    return (x + m - 1) // m * m


def _vmem_capacity_bytes():
    """Physical VMEM of the chip we are running on (v5e/v6e: 128 MiB, v7x: 64 MiB)."""
    try:
        return int(pltpu.get_tpu_info().vmem_capacity_bytes)
    except Exception:
        return 64 * 1024 * 1024  # conservative fallback: assume the smallest (v7x)


def _choose_tiles(n, c, itemsize):
    """Pick (rows, cols) of one logits block plus the scoped-VMEM limit.

    Budgets the full in-flight working set, not just the native-dtype input
    block: 2x native-dtype input (double-buffered DMA) + ~2 f32-wide compute
    temporaries (the upcast block and exp(pred - m)).  The scoped limit comes
    from the physical VMEM of the current generation, so the same code sizes
    correctly on v5e/v6e (128 MiB) and v7x (64 MiB).
    """
    cap = _vmem_capacity_bytes()
    vmem_limit = min(cap * 3 // 4, 100 * 1024 * 1024)
    budget = (vmem_limit * 3) // 5  # headroom for scratch, masks, partial sums

    row_align = 16 if itemsize < 4 else 8  # bf16 packs 2 rows per sublane
    tn = 256
    # Megacore load balance (v7x has 2 TensorCores): keep >= 2 row blocks.
    while tn > 2 * row_align and (n + tn - 1) // tn < 2:
        tn //= 2
    tn = max(_round_up(tn, row_align), row_align)

    bytes_per_elem = 2 * itemsize + 2 * 4
    c128 = _round_up(c, _LANE)
    max_tc = max((budget // (tn * bytes_per_elem)) // _LANE * _LANE, _LANE)
    tc = min(c128, max_tc)
    return tn, tc, vmem_limit


# ---------------------------------------------------------------------------
# Cross-entropy criterion (nn.CrossEntropyLoss over [N, C] logits)
# ---------------------------------------------------------------------------
def _ce_kernel(pred_ref, tgt_ref, out_ref, m_sc, l_sc, t_sc, *, last_cols):
    """One (TN, TC) logits block; online logsumexp across the class (last) grid axis.

    pred_ref: (TN, TC) logits (native dtype), tgt_ref: (TN, 1) int32 targets,
    out_ref:  (TN, 1) f32 per-example loss, written once (on the last chunk).
    last_cols: number of valid columns in the FINAL class chunk (static). If it
    equals TC, the class dim divides evenly and no masking code is emitted;
    otherwise the mask is confined to the last chunk via a duplicated path.
    """
    j = pl.program_id(1)
    last = pl.num_programs(1) - 1

    @pl.when(j == 0)
    def _init():
        m_sc[...] = jnp.full(m_sc.shape, -jnp.inf, jnp.float32)
        l_sc[...] = jnp.zeros(l_sc.shape, jnp.float32)
        t_sc[...] = jnp.zeros(t_sc.shape, jnp.float32)

    tn, tc = pred_ref.shape
    pred = pred_ref[...].astype(jnp.float32)  # cast after DMA (bf16 in -> f32 compute)
    col = jax.lax.broadcasted_iota(jnp.int32, (tn, tc), 1)  # local column ids
    tgt_rel = tgt_ref[...] - j * tc  # (TN,1): target id relative to this chunk

    def _accumulate(p):
        # One-hot gather of the target logit: local iota vs per-row relative id
        # (no per-element "+ j*TC" add).  Only the chunk containing the target
        # contributes; ignore_index (-100) never matches.
        hit = col == tgt_rel
        t_sc[...] += jnp.sum(jnp.where(hit, p, 0.0), axis=-1, keepdims=True)
        # Online (streaming) logsumexp update for this class chunk.
        m_prev = m_sc[...]
        m_new = jnp.maximum(m_prev, jnp.max(p, axis=-1, keepdims=True))
        l_sc[...] = l_sc[...] * jnp.exp(m_prev - m_new) + jnp.sum(
            jnp.exp(p - m_new), axis=-1, keepdims=True)
        m_sc[...] = m_new

    def _finalize():
        out_ref[...] = m_sc[...] + jnp.log(l_sc[...]) - t_sc[...]

    if last_cols == tc:
        # Class dim divides evenly: hot path, no masking anywhere.
        _accumulate(pred)

        @pl.when(j == last)
        def _fin():
            _finalize()
    else:
        # Ragged class dim: mask out-of-range columns on the last chunk only.
        @pl.when(j != last)
        def _main():
            _accumulate(pred)

        @pl.when(j == last)
        def _tail():
            _accumulate(jnp.where(col < last_cols, pred, _NEG_BIG))
            _finalize()


def _ce_reference(pred, targets, ignore_index=-100):
    """Plain-JAX reference / small-shape fallback (matches nn.CrossEntropyLoss)."""
    logits = pred.astype(jnp.float32)
    logp = jax.nn.log_softmax(logits, axis=-1)
    tgt_safe = jnp.where(targets == ignore_index, 0, targets).astype(jnp.int32)
    picked = jnp.take_along_axis(logp, tgt_safe[:, None], axis=-1)[:, 0]
    valid = targets != ignore_index
    count = jnp.sum(valid.astype(jnp.float32))
    return jnp.sum(jnp.where(valid, -picked, 0.0)) / count


def cross_entropy_loss(pred, targets, *, ignore_index=-100,
                       block_rows=None, block_cols=None,
                       min_kernel_elements=32768):
    """pred: (N, C) logits (f32/bf16/f16); targets: (N,) int class ids -> scalar f32.

    Matches torch.nn.CrossEntropyLoss(reduction="mean", ignore_index=-100):
    ignored rows are excluded from numerator and denominator.  Targets outside
    [0, C) other than ignore_index yield loss = logsumexp for that row (no
    target-logit contribution) instead of an error.
    """
    n, c = pred.shape
    targets = targets.astype(jnp.int32)

    # Tiny shapes (e.g. the 5-class BERT head): launch overhead dominates.
    if n * c < min_kernel_elements:
        return _ce_reference(pred, targets, ignore_index)

    itemsize = jnp.dtype(pred.dtype).itemsize
    tn, tc, vmem_limit = _choose_tiles(n, c, itemsize)
    row_align = 16 if itemsize < 4 else 8
    if block_rows is not None:
        tn = max(_round_up(block_rows, row_align), row_align)
    if block_cols is not None:
        tc = max(_round_up(block_cols, _LANE), _LANE)
    tc = min(tc, _round_up(c, _LANE))

    grid = (pl.cdiv(n, tn), pl.cdiv(c, tc))
    last_cols = c - (grid[1] - 1) * tc  # valid columns in the final class chunk

    tgt2d = targets.reshape(n, 1)

    per_example = pl.pallas_call(
        functools.partial(_ce_kernel, last_cols=last_cols),
        out_shape=jax.ShapeDtypeStruct((n, 1), jnp.float32),
        grid=grid,
        in_specs=[
            pl.BlockSpec((tn, tc), lambda i, j: (i, j)),   # logits, native dtype
            pl.BlockSpec((tn, 1), lambda i, j: (i, 0)),    # int32 targets (tiny)
        ],
        out_specs=pl.BlockSpec((tn, 1), lambda i, j: (i, 0)),
        scratch_shapes=[
            pltpu.VMEM((tn, 1), jnp.float32),  # running max m
            pltpu.VMEM((tn, 1), jnp.float32),  # running sum l
            pltpu.VMEM((tn, 1), jnp.float32),  # target-logit accumulator
        ],
        compiler_params=pltpu.CompilerParams(
            # Rows independent -> parallel (both TCs on v7x); class reduction
            # is the last grid axis -> arbitrary.
            dimension_semantics=("parallel", "arbitrary"),
            vmem_limit_bytes=vmem_limit,
        ),
    )(pred, tgt2d)

    per_example = per_example[:, 0]
    valid = targets != ignore_index
    count = jnp.sum(valid.astype(jnp.float32))
    total = jnp.sum(jnp.where(valid, per_example, 0.0))
    return total / count  # 0/0 -> nan, matching torch when everything is ignored


# ---------------------------------------------------------------------------
# Classifier head forward (flag == 0 path), dropout = identity at inference
# ---------------------------------------------------------------------------
def _bert_head_kernel(x_ref, w1_ref, b1_ref, w2_ref, b2_ref, w3_ref, b3_ref, out_ref):
    x = x_ref[...].astype(jnp.float32)
    h = jnp.dot(x, w1_ref[...].astype(jnp.float32),
                preferred_element_type=jnp.float32) + b1_ref[...]
    h = jnp.maximum(h, 0.0)                                  # ReLU inside pre_classifier
    h = jnp.dot(h, w2_ref[...].astype(jnp.float32),
                preferred_element_type=jnp.float32) + b2_ref[...]
    h = jnp.maximum(h, 0.0)                                  # ReLU after pre_classifier
    logits = jnp.dot(h, w3_ref[...].astype(jnp.float32),
                     preferred_element_type=jnp.float32) + b3_ref[...]
    z = logits - jnp.max(logits, axis=-1, keepdims=True)     # softmax(dim=1)
    e = jnp.exp(z)
    out_ref[...] = (e / jnp.sum(e, axis=-1, keepdims=True)).astype(out_ref.dtype)


def bert_classifier_head(cls_embedding, params, *, block_rows=128):
    """flag==0 forward: (B, 768) pooled [CLS] embedding -> (B, 5) softmax probs.

    Rows are tiled (parallel across v7x cores for large batches); the weights
    use a constant block index so they stay resident in VMEM across row blocks.
    """
    w1, b1, w2, b2, w3, b3 = params
    b, d_in = cls_embedding.shape
    n_cls = w3.shape[1]
    tb = min(max(_round_up(b, _SUBLANE), _SUBLANE), block_rows)
    grid = (pl.cdiv(b, tb),)

    def _full(i):
        return (0, 0)

    return pl.pallas_call(
        _bert_head_kernel,
        out_shape=jax.ShapeDtypeStruct((b, n_cls), jnp.float32),
        grid=grid,
        in_specs=[
            pl.BlockSpec((tb, d_in), lambda i: (i, 0)),
            pl.BlockSpec(w1.shape, _full), pl.BlockSpec((1, b1.shape[0]), _full),
            pl.BlockSpec(w2.shape, _full), pl.BlockSpec((1, b2.shape[0]), _full),
            pl.BlockSpec(w3.shape, _full), pl.BlockSpec((1, b3.shape[0]), _full),
        ],
        out_specs=pl.BlockSpec((tb, n_cls), lambda i: (i, 0)),
        compiler_params=pltpu.CompilerParams(
            dimension_semantics=("parallel",),
        ),
    )(cls_embedding, w1, b1.reshape(1, -1), w2, b2.reshape(1, -1),
      w3, b3.reshape(1, -1))


def _head_reference(x, params):
    w1, b1, w2, b2, w3, b3 = params
    h = jnp.maximum(x @ w1 + b1, 0.0)
    h = jnp.maximum(h @ w2 + b2, 0.0)
    return jax.nn.softmax(h @ w3 + b3, axis=-1)


if __name__ == "__main__":
    key = jax.random.PRNGKey(0)
    ks = jax.random.split(key, 12)

    # --- Classifier head forward (flag==0): batch=4, 768 -> 600 -> 300 -> 5.
    B, H_IN, H1, H2, NCLS = 4, 768, 600, 300, 5
    cls_emb = jax.random.normal(ks[0], (B, H_IN), jnp.float32)
    head_params = (
        jax.random.normal(ks[1], (H_IN, H1), jnp.float32) * 0.02,
        jax.random.normal(ks[2], (H1,), jnp.float32) * 0.02,
        jax.random.normal(ks[3], (H1, H2), jnp.float32) * 0.02,
        jax.random.normal(ks[4], (H2,), jnp.float32) * 0.02,
        jax.random.normal(ks[5], (H2, NCLS), jnp.float32) * 0.02,
        jax.random.normal(ks[6], (NCLS,), jnp.float32) * 0.02,
    )
    probs = jax.block_until_ready(bert_classifier_head(cls_emb, head_params))
    ref_probs = _head_reference(cls_emb, head_params)
    assert jnp.allclose(probs, ref_probs, atol=3e-3, rtol=3e-3), (probs, ref_probs)
    assert jnp.allclose(jnp.sum(probs, axis=-1), 1.0, atol=1e-4)

    # --- CE test 1: f32 logits, small forced tiles -> ragged rows (20 % 8),
    #     ragged class edge (300 % 128 = 44), ignore_index rows.
    N1, C1 = 20, 300
    pred1 = jax.random.normal(ks[7], (N1, C1), dtype=jnp.float32)
    tgt1 = jax.random.randint(ks[8], (N1,), 0, C1, dtype=jnp.int32)
    tgt1 = tgt1.at[3].set(-100).at[17].set(-100)
    loss1 = cross_entropy_loss(pred1, tgt1, block_rows=8, block_cols=128,
                               min_kernel_elements=0)  # force the Pallas path
    loss1 = jax.block_until_ready(loss1)
    ref1 = _ce_reference(pred1, tgt1)
    assert jnp.allclose(loss1, ref1, atol=2e-5, rtol=2e-5), (loss1, ref1)

    # --- CE test 2: bf16 logits (native-dtype DMA), evenly dividing class chunks.
    N2, C2 = 64, 1024
    pred2 = jax.random.normal(ks[9], (N2, C2), dtype=jnp.float32).astype(jnp.bfloat16)
    tgt2 = jax.random.randint(ks[10], (N2,), 0, C2, dtype=jnp.int32)
    loss2 = cross_entropy_loss(pred2, tgt2, block_cols=256, min_kernel_elements=0)
    loss2 = jax.block_until_ready(loss2)
    ref2 = _ce_reference(pred2, tgt2)
    assert jnp.allclose(loss2, ref2, atol=1e-4, rtol=1e-4), (loss2, ref2)

    # --- CE test 3: auto-chosen tiles, single ragged class chunk, ragged rows.
    N3, C3 = 136, 2500
    pred3 = jax.random.normal(ks[11], (N3, C3), dtype=jnp.float32)
    tgt3 = jax.random.randint(ks[8], (N3,), 0, C3, dtype=jnp.int32)
    loss3 = jax.block_until_ready(
        cross_entropy_loss(pred3, tgt3, min_kernel_elements=0))
    ref3 = _ce_reference(pred3, tgt3)
    assert jnp.allclose(loss3, ref3, atol=2e-5, rtol=2e-5), (loss3, ref3)

    # --- CE test 4: tiny shape (BERT classifier: 5 classes) -> plain-JAX fallback.
    pred4 = jax.random.normal(ks[0], (4, 5), dtype=jnp.float32)
    tgt4 = jax.random.randint(ks[1], (4,), 0, 5, dtype=jnp.int32)
    loss4 = jax.block_until_ready(cross_entropy_loss(pred4, tgt4))
    assert jnp.isfinite(loss4), loss4

    print("KERNEL_OK")
</pallas_src>

<mosaic_0001>
module attributes {stable_mosaic.version = 11 : i64} {
  func.func @_bert_head_kernel(%arg0: i32, %arg1: memref<8x768xf32, #tpu.memory_space<vmem>>, %arg2: memref<768x600xf32, #tpu.memory_space<vmem>>, %arg3: memref<1x600xf32, #tpu.memory_space<vmem>>, %arg4: memref<600x300xf32, #tpu.memory_space<vmem>>, %arg5: memref<1x300xf32, #tpu.memory_space<vmem>>, %arg6: memref<300x5xf32, #tpu.memory_space<vmem>>, %arg7: memref<1x5xf32, #tpu.memory_space<vmem>>, %arg8: memref<8x5xf32, #tpu.memory_space<vmem>>) attributes {dimension_semantics = [#tpu.dimension_semantics<parallel>], iteration_bounds = array<i64: 1>, scalar_prefetch = 0 : i64, scratch_operands = 0 : i64, tpu.core_type = #tpu.core_type<tc>, window_params = [{transform_indices = @transform_0, window_bounds = array<i64: 8, 768>}, {pipeline_mode = #tpu.pipeline_mode<synchronous>, transform_indices = @transform_1, window_bounds = array<i64: 768, 600>}, {pipeline_mode = #tpu.pipeline_mode<synchronous>, transform_indices = @transform_2, window_bounds = array<i64: 1, 600>}, {pipeline_mode = #tpu.pipeline_mode<synchronous>, transform_indices = @transform_3, window_bounds = array<i64: 600, 300>}, {pipeline_mode = #tpu.pipeline_mode<synchronous>, transform_indices = @transform_4, window_bounds = array<i64: 1, 300>}, {pipeline_mode = #tpu.pipeline_mode<synchronous>, transform_indices = @transform_5, window_bounds = array<i64: 300, 5>}, {pipeline_mode = #tpu.pipeline_mode<synchronous>, transform_indices = @transform_6, window_bounds = array<i64: 1, 5>}, {transform_indices = @transform_7, window_bounds = array<i64: 8, 5>}]} {
    %c0 = arith.constant 0 : index
    %c0_0 = arith.constant 0 : index
    %0 = vector.load %arg1[%c0, %c0_0] : memref<8x768xf32, #tpu.memory_space<vmem>>, vector<8x768xf32>
    %c0_1 = arith.constant 0 : index
    %c0_2 = arith.constant 0 : index
    %1 = vector.load %arg2[%c0_1, %c0_2] : memref<768x600xf32, #tpu.memory_space<vmem>>, vector<768x600xf32>
    %cst = arith.constant dense<0.000000e+00> : vector<8x600xf32>
    %2 = tpu.matmul %0, %1, %cst {dimension_numbers = #tpu.dot_dimension_numbers<[1], [0], [0], [1], [0, 0, 1, 1], [], []>} : vector<8x768xf32>, vector<768x600xf32>, vector<8x600xf32> -> vector<8x600xf32>
    %c0_3 = arith.constant 0 : index
    %c0_4 = arith.constant 0 : index
    %3 = vector.load %arg3[%c0_3, %c0_4] : memref<1x600xf32, #tpu.memory_space<vmem>>, vector<1x600xf32>
    %4 = vector.broadcast %3 : vector<1x600xf32> to vector<8x600xf32>
    %5 = arith.addf %2, %4 : vector<8x600xf32>
    %cst_5 = arith.constant 0.000000e+00 : f32
    %6 = vector.broadcast %cst_5 : f32 to vector<8x600xf32>
    %7 = arith.maximumf %5, %6 : vector<8x600xf32>
    %c0_6 = arith.constant 0 : index
    %c0_7 = arith.constant 0 : index
    %8 = vector.load %arg4[%c0_6, %c0_7] : memref<600x300xf32, #tpu.memory_space<vmem>>, vector<600x300xf32>
    %cst_8 = arith.constant dense<0.000000e+00> : vector<8x300xf32>
    %9 = tpu.matmul %7, %8, %cst_8 {dimension_numbers = #tpu.dot_dimension_numbers<[1], [0], [0], [1], [0, 0, 1, 1], [], []>} : vector<8x600xf32>, vector<600x300xf32>, vector<8x300xf32> -> vector<8x300xf32>
    %c0_9 = arith.constant 0 : index
    %c0_10 = arith.constant 0 : index
    %10 = vector.load %arg5[%c0_9, %c0_10] : memref<1x300xf32, #tpu.memory_space<vmem>>, vector<1x300xf32>
    %11 = vector.broadcast %10 : vector<1x300xf32> to vector<8x300xf32>
    %12 = arith.addf %9, %11 : vector<8x300xf32>
    %cst_11 = arith.constant 0.000000e+00 : f32
    %13 = vector.broadcast %cst_11 : f32 to vector<8x300xf32>
    %14 = arith.maximumf %12, %13 : vector<8x300xf32>
    %c0_12 = arith.constant 0 : index
    %c0_13 = arith.constant 0 : index
    %15 = vector.load %arg6[%c0_12, %c0_13] : memref<300x5xf32, #tpu.memory_space<vmem>>, vector<300x5xf32>
    %cst_14 = arith.constant dense<0.000000e+00> : vector<8x5xf32>
    %16 = tpu.matmul %14, %15, %cst_14 {dimension_numbers = #tpu.dot_dimension_numbers<[1], [0], [0], [1], [0, 0, 1, 1], [], []>} : vector<8x300xf32>, vector<300x5xf32>, vector<8x5xf32> -> vector<8x5xf32>
    %c0_15 = arith.constant 0 : index
    %c0_16 = arith.constant 0 : index
    %17 = vector.load %arg7[%c0_15, %c0_16] : memref<1x5xf32, #tpu.memory_space<vmem>>, vector<1x5xf32>
    %18 = vector.broadcast %17 : vector<1x5xf32> to vector<8x5xf32>
    %19 = arith.addf %16, %18 : vector<8x5xf32>
    %cst_17 = arith.constant dense<0xFF800000> : vector<8xf32>
    %20 = vector.multi_reduction <maximumf>, %19, %cst_17 [1] : vector<8x5xf32> to vector<8xf32>
    %21 = vector.shape_cast %20 : vector<8xf32> to vector<8x1xf32>
    %22 = vector.broadcast %21 : vector<8x1xf32> to vector<8x5xf32>
    %23 = arith.subf %19, %22 : vector<8x5xf32>
    %24 = math.exp %23 : vector<8x5xf32>
    %cst_18 = arith.constant dense<0.000000e+00> : vector<8xf32>
    %25 = vector.multi_reduction <add>, %24, %cst_18 [1] : vector<8x5xf32> to vector<8xf32>
    %26 = vector.shape_cast %25 : vector<8xf32> to vector<8x1xf32>
    %27 = vector.broadcast %26 : vector<8x1xf32> to vector<8x5xf32>
    %28 = arith.divf %24, %27 : vector<8x5xf32>
    %c0_19 = arith.constant 0 : index
    %c0_20 = arith.constant 0 : index
    %29 = vector.load %arg8[%c0_19, %c0_20] : memref<8x5xf32, #tpu.memory_space<vmem>>, vector<8x5xf32>
    tpu.vector_store %arg8[%c0_19, %c0_20], %28 {strides = array<i32>} : memref<8x5xf32, #tpu.memory_space<vmem>>, vector<8x5xf32>,
    return
  }
  func.func @transform_0(%arg0: i32) -> (i32, i32) {
    %c0_i32 = arith.constant 0 : i32
    %c0_i32_0 = arith.constant 0 : i32
    return %arg0, %c0_i32 : i32, i32
  }
  func.func @transform_1(%arg0: i32) -> (i32, i32) {
    %c0_i32 = arith.constant 0 : i32
    %c0_i32_0 = arith.constant 0 : i32
    %c0_i32_1 = arith.constant 0 : i32
    return %c0_i32, %c0_i32_0 : i32, i32
  }
  func.func @transform_2(%arg0: i32) -> (i32, i32) {
    %c0_i32 = arith.constant 0 : i32
    %c0_i32_0 = arith.constant 0 : i32
    %c0_i32_1 = arith.constant 0 : i32
    return %c0_i32, %c0_i32_0 : i32, i32
  }
  func.func @transform_3(%arg0: i32) -> (i32, i32) {
    %c0_i32 = arith.constant 0 : i32
    %c0_i32_0 = arith.constant 0 : i32
    %c0_i32_1 = arith.constant 0 : i32
    return %c0_i32, %c0_i32_0 : i32, i32
  }
  func.func @transform_4(%arg0: i32) -> (i32, i32) {
    %c0_i32 = arith.constant 0 : i32
    %c0_i32_0 = arith.constant 0 : i32
    %c0_i32_1 = arith.constant 0 : i32
    return %c0_i32, %c0_i32_0 : i32, i32
  }
  func.func @transform_5(%arg0: i32) -> (i32, i32) {
    %c0_i32 = arith.constant 0 : i32
    %c0_i32_0 = arith.constant 0 : i32
    %c0_i32_1 = arith.constant 0 : i32
    return %c0_i32, %c0_i32_0 : i32, i32
  }
  func.func @transform_6(%arg0: i32) -> (i32, i32) {
    %c0_i32 = arith.constant 0 : i32
    %c0_i32_0 = arith.constant 0 : i32
    %c0_i32_1 = arith.constant 0 : i32
    return %c0_i32, %c0_i32_0 : i32, i32
  }
  func.func @transform_7(%arg0: i32) -> (i32, i32) {
    %c0_i32 = arith.constant 0 : i32
    %c0_i32_0 = arith.constant 0 : i32
    return %arg0, %c0_i32 : i32, i32
  }
}

</mosaic_0001>

<llo_original>
// kernel: tpu_custom_call.1
$region0: #{tpu_custom_call.1}
  #allocation0 [shape = 'u32[]', space=smem, size = 0x4, offset = 0x4, fixed_abs, tag = 'smem constant byte address 0x4 - core index']
  #allocation1 [shape = 'u32[144,128]{1,0:T(1,128)}', space=vmem, size = 0x12000, scoped, tag = 'internal scratch']
  %s0 = inlined_call_operand.vmem [shape: f32[4,768], index: 0, kind: input, shape index: {}]
  %s1 = inlined_call_operand.vmem [shape: f32[768,600], index: 1, kind: input, shape index: {}]
  %s2 = inlined_call_operand.vmem [shape: f32[1,600], index: 2, kind: input, shape index: {}]
  %s3 = inlined_call_operand.vmem [shape: f32[600,300], index: 3, kind: input, shape index: {}]
  %s4 = inlined_call_operand.vmem [shape: f32[1,300], index: 4, kind: input, shape index: {}]
  %s5 = inlined_call_operand.vmem [shape: f32[300,5], index: 5, kind: input, shape index: {}]
  %s6 = inlined_call_operand.vmem [shape: f32[1,5], index: 6, kind: input, shape index: {}]
  %s7 = inlined_call_operand.hbm [shape: f32[4,5], index: 7, kind: output, shape index: {}]
  %s8 = sld [smem:[#allocation0]]
  $region38: #{tpu_custom_call.1} parent=0
    _
  %s10 = ssub.s32 1, %s8
  %s11 = scalar_select 0, %s10, %s8
  $region1: #{tpu_custom_call.1} parent=0
    #allocation2 [shape = 'u8[4096]{0}', space=vmem, size = 0x1000, scoped, tag = 'output window, operand 0, single buffered']
    #allocation3 [shape = 's32[1]{0}', space=sflag, size = 0x4, scoped, tag = 'scoped memory for tpu_custom_call.1']
    %12 = vsyncpa [#allocation3], 0
    // Predicated region
    $region2: #{tpu_custom_call.1} parent=1 // pred_check
      _
    $region3: #{tpu_custom_call.1} parent=1 // pred_check_branch
      %14 = sbr.rel (0) target = $region5
    $region4: #{tpu_custom_call.1} parent=1 // pred_region
      _
    $region5: #{tpu_custom_call.1} parent=1 // pred_fallthru
      _
    // Predicated region
    $region6: #{tpu_custom_call.1} parent=1 // pred_check
      _
    $region7: #{tpu_custom_call.1} parent=1 // pred_check_branch
      %16 = sbr.rel (0) target = $region9
    $region8: #{tpu_custom_call.1} parent=1 // pred_region
      _
    $region9: #{tpu_custom_call.1} parent=1 // pred_fallthru
      _
    // Predicated region
    $region10: #{tpu_custom_call.1} parent=1 // pred_check
      _
    $region11: #{tpu_custom_call.1} parent=1 // pred_check_branch
      %18 = sbr.rel (0) target = $region13
    $region12: #{tpu_custom_call.1} parent=1 // pred_region
      _
    $region13: #{tpu_custom_call.1} parent=1 // pred_fallthru
      _
    // Predicated region
    $region14: #{tpu_custom_call.1} parent=1 // pred_check
      _
    $region15: #{tpu_custom_call.1} parent=1 // pred_check_branch
      %20 = sbr.rel (0) target = $region17
    $region16: #{tpu_custom_call.1} parent=1 // pred_region
      _
    $region17: #{tpu_custom_call.1} parent=1 // pred_fallthru
      _
    // Predicated region
    $region18: #{tpu_custom_call.1} parent=1 // pred_check
      _
    $region19: #{tpu_custom_call.1} parent=1 // pred_check_branch
      %22 = sbr.rel (0) target = $region21
    $region20: #{tpu_custom_call.1} parent=1 // pred_region
      _
    $region21: #{tpu_custom_call.1} parent=1 // pred_fallthru
      _
    // Predicated region
    $region22: #{tpu_custom_call.1} parent=1 // pred_check
      _
    $region23: #{tpu_custom_call.1} parent=1 // pred_check_branch
      %24 = sbr.rel (0) target = $region25
    $region24: #{tpu_custom_call.1} parent=1 // pred_region
      _
    $region25: #{tpu_custom_call.1} parent=1 // pred_fallthru
      _
    // Predicated region
    $region26: #{tpu_custom_call.1} parent=1 // pred_check
      _
    $region27: #{tpu_custom_call.1} parent=1 // pred_check_branch
      %26 = sbr.rel (0) target = $region29
    $region28: #{tpu_custom_call.1} parent=1 // pred_region
      _
    $region29: #{tpu_custom_call.1} parent=1 // pred_fallthru
      _
    %v27 = vld [vmem:[%s0] sm:$0xff]
    %v28 = vld [vmem:[%s0 + $0x8] sm:$0xff]
    %v29 = vld [vmem:[%s0 + $0x10] sm:$0xff]
    %v30 = vld [vmem:[%s0 + $0x18] sm:$0xff]
    %v31 = vld [vmem:[%s0 + $0x20] sm:$0xff]
    %v32 = vld [vmem:[%s0 + $0x28] sm:$0xff]
    %v33 = vld [vmem:[%s1] sm:$0xff]
    %v34 = vld [vmem:[%s1 + $0x8] sm:$0xff]
    %v35 = vld [vmem:[%s1 + $0x10] sm:$0xff]
    %v36 = vld [vmem:[%s1 + $0x18] sm:$0xff]
    %v37 = vld [vmem:[%s1 + $0x20] sm:$0xff]
    %v38 = vld [vmem:[%s1 + $0x28] sm:$0xff]
    %v39 = vld [vmem:[%s1 + $0x30] sm:$0xff]
    %v40 = vld [vmem:[%s1 + $0x38] sm:$0xff]
    %v41 = vld [vmem:[%s1 + $0x40] sm:$0xff]
    %v42 = vld [vmem:[%s1 + $0x48] sm:$0xff]
    %v43 = vld [vmem:[%s1 + $0x50] sm:$0xff]
    %v44 = vld [vmem:[%s1 + $0x58] sm:$0xff]
    %v45 = vld [vmem:[%s1 + $0x60] sm:$0xff]
    %v46 = vld [vmem:[%s1 + $0x68] sm:$0xff]
    %v47 = vld [vmem:[%s1 + $0x70] sm:$0xff]
    %v48 = vld [vmem:[%s1 + $0x78] sm:$0xff]
    %v49 = vld [vmem:[%s1 + $0x80] sm:$0xff]
    %v50 = vld [vmem:[%s1 + $0x88] sm:$0xff]
    %v51 = vld [vmem:[%s1 + $0x90] sm:$0xff]
    %v52 = vld [vmem:[%s1 + $0x98] sm:$0xff]
    %v53 = vld [vmem:[%s1 + $0xa0] sm:$0xff]
    %v54 = vld [vmem:[%s1 + $0xa8] sm:$0xff]
    %v55 = vld [vmem:[%s1 + $0xb0] sm:$0xff]
    %v56 = vld [vmem:[%s1 + $0xb8] sm:$0xff]
    %v57 = vld [vmem:[%s1 + $0xc0] sm:$0xff]
    %v58 = vld [vmem:[%s1 + $0xc8] sm:$0xff]
    %v59 = vld [vmem:[%s1 + $0xd0] sm:$0xff]
    %v60 = vld [vmem:[%s1 + $0xd8] sm:$0xff]
    %v61 = vld [vmem:[%s1 + $0xe0] sm:$0xff]
    %v62 = vld [vmem:[%s1 + $0xe8] sm:$0xff]
    %v63 = vld [vmem:[%s1 + $0xf0] sm:$0xff]
    %v64 = vld [vmem:[%s1 + $0xf8] sm:$0xff]
    %v65 = vld [vmem:[%s1 + $0x100] sm:$0xff]
    %v66 = vld [vmem:[%s1 + $0x108] sm:$0xff]
    %v67 = vld [vmem:[%s1 + $0x110] sm:$0xff]
    %v68 = vld [vmem:[%s1 + $0x118] sm:$0xff]
    %v69 = vld [vmem:[%s1 + $0x120] sm:$0xff]
    %v70 = vld [vmem:[%s1 + $0x128] sm:$0xff]
    %v71 = vld [vmem:[%s1 + $0x130] sm:$0xff]
    %v72 = vld [vmem:[%s1 + $0x138] sm:$0xff]
    %v73 = vld [vmem:[%s1 + $0x140] sm:$0xff]
    %v74 = vld [vmem:[%s1 + $0x148] sm:$0xff]
    %v75 = vld [vmem:[%s1 + $0x150] sm:$0xff]
    %v76 = vld [vmem:[%s1 + $0x158] sm:$0xff]
    %v77 = vld [vmem:[%s1 + $0x160] sm:$0xff]
    %v78 = vld [vmem:[%s1 + $0x168] sm:$0xff]
    %v79 = vld [vmem:[%s1 + $0x170] sm:$0xff]
    %v80 = vld [vmem:[%s1 + $0x178] sm:$0xff]
    %v81 = vld [vmem:[%s1 + $0x180] sm:$0xff]
    %v82 = vld [vmem:[%s1 + $0x188] sm:$0xff]
    %v83 = vld [vmem:[%s1 + $0x190] sm:$0xff]
    %v84 = vld [vmem:[%s1 + $0x198] sm:$0xff]
    %v85 = vld [vmem:[%s1 + $0x1a0] sm:$0xff]
    %v86 = vld [vmem:[%s1 + $0x1a8] sm:$0xff]
    %v87 = vld [vmem:[%s1 + $0x1b0] sm:$0xff]
    %v88 = vld [vmem:[%s1 + $0x1b8] sm:$0xff]
    %v89 = vld [vmem:[%s1 + $0x1c0] sm:$0xff]
    %v90 = vld [vmem:[%s1 + $0x1c8] sm:$0xff]
    %v91 = vld [vmem:[%s1 + $0x1d0] sm:$0xff]
    %v92 = vld [vmem:[%s1 + $0x1d8] sm:$0xff]
    %v93 = vld [vmem:[%s1 + $0x1e0] sm:$0xff]
    %v94 = vld [vmem:[%s1 + $0x1e8] sm:$0xff]
    %v95 = vld [vmem:[%s1 + $0x1f0] sm:$0xff]
    %v96 = vld [vmem:[%s1 + $0x1f8] sm:$0xff]
    %v97 = vld [vmem:[%s1 + $0x200] sm:$0xff]
    %v98 = vld [vmem:[%s1 + $0x208] sm:$0xff]
    %v99 = vld [vmem:[%s1 + $0x210] sm:$0xff]
    %v100 = vld [vmem:[%s1 + $0x218] sm:$0xff]
    %v101 = vld [vmem:[%s1 + $0x220] sm:$0xff]
    %v102 = vld [vmem:[%s1 + $0x228] sm:$0xff]
    %v103 = vld [vmem:[%s1 + $0x230] sm:$0xff]
    %v104 = vld [vmem:[%s1 + $0x238] sm:$0xff]
    %v105 = vld [vmem:[%s1 + $0x240] sm:$0xff]
    %v106 = vld [vmem:[%s1 + $0x248] sm:$0xff]
    %v107 = vld [vmem:[%s1 + $0x250] sm:$0xff]
    %v108 = vld [vmem:[%s1 + $0x258] sm:$0xff]
    %v109 = vld [vmem:[%s1 + $0x260] sm:$0xff]
    %v110 = vld [vmem:[%s1 + $0x268] sm:$0xff]
    %v111 = vld [vmem:[%s1 + $0x270] sm:$0xff]
    %v112 = vld [vmem:[%s1 + $0x278] sm:$0xff]
    %v113 = vld [vmem:[%s1 + $0x280] sm:$0xff]
    %v114 = vld [vmem:[%s1 + $0x288] sm:$0xff]
    %v115 = vld [vmem:[%s1 + $0x290] sm:$0xff]
    %v116 = vld [vmem:[%s1 + $0x298] sm:$0xff]
    %v117 = vld [vmem:[%s1 + $0x2a0] sm:$0xff]
    %v118 = vld [vmem:[%s1 + $0x2a8] sm:$0xff]
    %v119 = vld [vmem:[%s1 + $0x2b0] sm:$0xff]
    %v120 = vld [vmem:[%s1 + $0x2b8] sm:$0xff]
    %v121 = vld [vmem:[%s1 + $0x2c0] sm:$0xff]
    %v122 = vld [vmem:[%s1 + $0x2c8] sm:$0xff]
    %v123 = vld [vmem:[%s1 + $0x2d0] sm:$0xff]
    %v124 = vld [vmem:[%s1 + $0x2d8] sm:$0xff]
    %v125 = vld [vmem:[%s1 + $0x2e0] sm:$0xff]
    %v126 = vld [vmem:[%s1 + $0x2e8] sm:$0xff]
    %v127 = vld [vmem:[%s1 + $0x2f0] sm:$0xff]
    %v128 = vld [vmem:[%s1 + $0x2f8] sm:$0xff]
    %v129 = vld [vmem:[%s1 + $0x300] sm:$0xff]
    %v130 = vld [vmem:[%s1 + $0x308] sm:$0xff]
    %v131 = vld [vmem:[%s1 + $0x310] sm:$0xff]
    %v132 = vld [vmem:[%s1 + $0x318] sm:$0xff]
    %v133 = vld [vmem:[%s1 + $0x320] sm:$0xff]
    %v134 = vld [vmem:[%s1 + $0x328] sm:$0xff]
    %v135 = vld [vmem:[%s1 + $0x330] sm:$0xff]
    %v136 = vld [vmem:[%s1 + $0x338] sm:$0xff]
    %v137 = vld [vmem:[%s1 + $0x340] sm:$0xff]
    %v138 = vld [vmem:[%s1 + $0x348] sm:$0xff]
    %v139 = vld [vmem:[%s1 + $0x350] sm:$0xff]
    %v140 = vld [vmem:[%s1 + $0x358] sm:$0xff]
    %v141 = vld [vmem:[%s1 + $0x360] sm:$0xff]
    %v142 = vld [vmem:[%s1 + $0x368] sm:$0xff]
    %v143 = vld [vmem:[%s1 + $0x370] sm:$0xff]
    %v144 = vld [vmem:[%s1 + $0x378] sm:$0xff]
    %v145 = vld [vmem:[%s1 + $0x380] sm:$0xff]
    %v146 = vld [vmem:[%s1 + $0x388] sm:$0xff]
    %v147 = vld [vmem:[%s1 + $0x390] sm:$0xff]
    %v148 = vld [vmem:[%s1 + $0x398] sm:$0xff]
    %v149 = vld [vmem:[%s1 + $0x3a0] sm:$0xff]
    %v150 = vld [vmem:[%s1 + $0x3a8] sm:$0xff]
    %v151 = vld [vmem:[%s1 + $0x3b0] sm:$0xff]
    %v152 = vld [vmem:[%s1 + $0x3b8] sm:$0xff]
    %v153 = vld [vmem:[%s1 + $0x3c0] sm:$0xff]
    %v154 = vld [vmem:[%s1 + $0x3c8] sm:$0xff]
    %v155 = vld [vmem:[%s1 + $0x3d0] sm:$0xff]
    %v156 = vld [vmem:[%s1 + $0x3d8] sm:$0xff]
    %v157 = vld [vmem:[%s1 + $0x3e0] sm:$0xff]
    %v158 = vld [vmem:[%s1 + $0x3e8] sm:$0xff]
    %v159 = vld [vmem:[%s1 + $0x3f0] sm:$0xff]
    %v160 = vld [vmem:[%s1 + $0x3f8] sm:$0xff]
    %v161 = vld [vmem:[%s1 + $0x400] sm:$0xff]
    %v162 = vld [vmem:[%s1 + $0x408] sm:$0xff]
    %v163 = vld [vmem:[%s1 + $0x410] sm:$0xff]
    %v164 = vld [vmem:[%s1 + $0x418] sm:$0xff]
    %v165 = vld [vmem:[%s1 + $0x420] sm:$0xff]
    %v166 = vld [vmem:[%s1 + $0x428] sm:$0xff]
    %v167 = vld [vmem:[%s1 + $0x430] sm:$0xff]
    %v168 = vld [vmem:[%s1 + $0x438] sm:$0xff]
    %v169 = vld [vmem:[%s1 + $0x440] sm:$0xff]
    %v170 = vld [vmem:[%s1 + $0x448] sm:$0xff]
    %v171 = vld [vmem:[%s1 + $0x450] sm:$0xff]
    %v172 = vld [vmem:[%s1 + $0x458] sm:$0xff]
    %v173 = vld [vmem:[%s1 + $0x460] sm:$0xff]
    %v174 = vld [vmem:[%s1 + $0x468] sm:$0xff]
    %v175 = vld [vmem:[%s1 + $0x470] sm:$0xff]
    %v176 = vld [vmem:[%s1 + $0x478] sm:$0xff]
    %v177 = vld [vmem:[%s1 + $0x480] sm:$0xff]
    %v178 = vld [vmem:[%s1 + $0x488] sm:$0xff]
    %v179 = vld [vmem:[%s1 + $0x490] sm:$0xff]
    %v180 = vld [vmem:[%s1 + $0x498] sm:$0xff]
    %v181 = vld [vmem:[%s1 + $0x4a0] sm:$0xff]
    %v182 = vld [vmem:[%s1 + $0x4a8] sm:$0xff]
    %v183 = vld [vmem:[%s1 + $0x4b0] sm:$0xff]
    %v184 = vld [vmem:[%s1 + $0x4b8] sm:$0xff]
    %v185 = vld [vmem:[%s1 + $0x4c0] sm:$0xff]
    %v186 = vld [vmem:[%s1 + $0x4c8] sm:$0xff]
    %v187 = vld [vmem:[%s1 + $0x4d0] sm:$0xff]
    %v188 = vld [vmem:[%s1 + $0x4d8] sm:$0xff]
    %v189 = vld [vmem:[%s1 + $0x4e0] sm:$0xff]
    %v190 = vld [vmem:[%s1 + $0x4e8] sm:$0xff]
    %v191 = vld [vmem:[%s1 + $0x4f0] sm:$0xff]
    %v192 = vld [vmem:[%s1 + $0x4f8] sm:$0xff]
    %v193 = vld [vmem:[%s1 + $0x500] sm:$0xff]
    %v194 = vld [vmem:[%s1 + $0x508] sm:$0xff]
    %v195 = vld [vmem:[%s1 + $0x510] sm:$0xff]
    %v196 = vld [vmem:[%s1 + $0x518] sm:$0xff]
    %v197 = vld [vmem:[%s1 + $0x520] sm:$0xff]
    %v198 = vld [vmem:[%s1 + $0x528] sm:$0xff]
    %v199 = vld [vmem:[%s1 + $0x530] sm:$0xff]
    %v200 = vld [vmem:[%s1 + $0x538] sm:$0xff]
    %v201 = vld [vmem:[%s1 + $0x540] sm:$0xff]
    %v202 = vld [vmem:[%s1 + $0x548] sm:$0xff]
    %v203 = vld [vmem:[%s1 + $0x550] sm:$0xff]
    %v204 = vld [vmem:[%s1 + $0x558] sm:$0xff]
    %v205 = vld [vmem:[%s1 + $0x560] sm:$0xff]
    %v206 = vld [vmem:[%s1 + $0x568] sm:$0xff]
    %v207 = vld [vmem:[%s1 + $0x570] sm:$0xff]
    %v208 = vld [vmem:[%s1 + $0x578] sm:$0xff]
    %v209 = vld [vmem:[%s1 + $0x580] sm:$0xff]
    %v210 = vld [vmem:[%s1 + $0x588] sm:$0xff]
    %v211 = vld [vmem:[%s1 + $0x590] sm:$0xff]
    %v212 = vld [vmem:[%s1 + $0x598] sm:$0xff]
    %v213 = vld [vmem:[%s1 + $0x5a0] sm:$0xff]
    %v214 = vld [vmem:[%s1 + $0x5a8] sm:$0xff]
    %v215 = vld [vmem:[%s1 + $0x5b0] sm:$0xff]
    %v216 = vld [vmem:[%s1 + $0x5b8] sm:$0xff]
    %v217 = vld [vmem:[%s1 + $0x5c0] sm:$0xff]
    %v218 = vld [vmem:[%s1 + $0x5c8] sm:$0xff]
    %v219 = vld [vmem:[%s1 + $0x5d0] sm:$0xff]
    %v220 = vld [vmem:[%s1 + $0x5d8] sm:$0xff]
    %v221 = vld [vmem:[%s1 + $0x5e0] sm:$0xff]
    %v222 = vld [vmem:[%s1 + $0x5e8] sm:$0xff]
    %v223 = vld [vmem:[%s1 + $0x5f0] sm:$0xff]
    %v224 = vld [vmem:[%s1 + $0x5f8] sm:$0xff]
    %v225 = vld [vmem:[%s1 + $0x600] sm:$0xff]
    %v226 = vld [vmem:[%s1 + $0x608] sm:$0xff]
    %v227 = vld [vmem:[%s1 + $0x610] sm:$0xff]
    %v228 = vld [vmem:[%s1 + $0x618] sm:$0xff]
    %v229 = vld [vmem:[%s1 + $0x620] sm:$0xff]
    %v230 = vld [vmem:[%s1 + $0x628] sm:$0xff]
    %v231 = vld [vmem:[%s1 + $0x630] sm:$0xff]
    %v232 = vld [vmem:[%s1 + $0x638] sm:$0xff]
    %v233 = vld [vmem:[%s1 + $0x640] sm:$0xff]
    %v234 = vld [vmem:[%s1 + $0x648] sm:$0xff]
    %v235 = vld [vmem:[%s1 + $0x650] sm:$0xff]
    %v236 = vld [vmem:[%s1 + $0x658] sm:$0xff]
    %v237 = vld [vmem:[%s1 + $0x660] sm:$0xff]
    %v238 = vld [vmem:[%s1 + $0x668] sm:$0xff]
    %v239 = vld [vmem:[%s1 + $0x670] sm:$0xff]
    %v240 = vld [vmem:[%s1 + $0x678] sm:$0xff]
    %v241 = vld [vmem:[%s1 + $0x680] sm:$0xff]
    %v242 = vld [vmem:[%s1 + $0x688] sm:$0xff]
    %v243 = vld [vmem:[%s1 + $0x690] sm:$0xff]
    %v244 = vld [vmem:[%s1 + $0x698] sm:$0xff]
    %v245 = vld [vmem:[%s1 + $0x6a0] sm:$0xff]
    %v246 = vld [vmem:[%s1 + $0x6a8] sm:$0xff]
    %v247 = vld [vmem:[%s1 + $0x6b0] sm:$0xff]
    %v248 = vld [vmem:[%s1 + $0x6b8] sm:$0xff]
    %v249 = vld [vmem:[%s1 + $0x6c0] sm:$0xff]
    %v250 = vld [vmem:[%s1 + $0x6c8] sm:$0xff]
    %v251 = vld [vmem:[%s1 + $0x6d0] sm:$0xff]
    %v252 = vld [vmem:[%s1 + $0x6d8] sm:$0xff]
    %v253 = vld [vmem:[%s1 + $0x6e0] sm:$0xff]
    %v254 = vld [vmem:[%s1 + $0x6e8] sm:$0xff]
    %v255 = vld [vmem:[%s1 + $0x6f0] sm:$0xff]
    %v256 = vld [vmem:[%s1 + $0x6f8] sm:$0xff]
    %v257 = vld [vmem:[%s1 + $0x700] sm:$0xff]
    %v258 = vld [vmem:[%s1 + $0x708] sm:$0xff]
    %v259 = vld [vmem:[%s1 + $0x710] sm:$0xff]
    %v260 = vld [vmem:[%s1 + $0x718] sm:$0xff]
    %v261 = vld [vmem:[%s1 + $0x720] sm:$0xff]
    %v262 = vld [vmem:[%s1 + $0x728] sm:$0xff]
    %v263 = vld [vmem:[%s1 + $0x730] sm:$0xff]
    %v264 = vld [vmem:[%s1 + $0x738] sm:$0xff]
    %v265 = vld [vmem:[%s1 + $0x740] sm:$0xff]
    %v266 = vld [vmem:[%s1 + $0x748] sm:$0xff]
    %v267 = vld [vmem:[%s1 + $0x750] sm:$0xff]
    %v268 = vld [vmem:[%s1 + $0x758] sm:$0xff]
    %v269 = vld [vmem:[%s1 + $0x760] sm:$0xff]
    %v270 = vld [vmem:[%s1 + $0x768] sm:$0xff]
    %v271 = vld [vmem:[%s1 + $0x770] sm:$0xff]
    %v272 = vld [vmem:[%s1 + $0x778] sm:$0xff]
    %v273 = vld [vmem:[%s1 + $0x780] sm:$0xff]
    %v274 = vld [vmem:[%s1 + $0x788] sm:$0xff]
    %v275 = vld [vmem:[%s1 + $0x790] sm:$0xff]
    %v276 = vld [vmem:[%s1 + $0x798] sm:$0xff]
    %v277 = vld [vmem:[%s1 + $0x7a0] sm:$0xff]
    %v278 = vld [vmem:[%s1 + $0x7a8] sm:$0xff]
    %v279 = vld [vmem:[%s1 + $0x7b0] sm:$0xff]
    %v280 = vld [vmem:[%s1 + $0x7b8] sm:$0xff]
    %v281 = vld [vmem:[%s1 + $0x7c0] sm:$0xff]
    %v282 = vld [vmem:[%s1 + $0x7c8] sm:$0xff]
    %v283 = vld [vmem:[%s1 + $0x7d0] sm:$0xff]
    %v284 = vld [vmem:[%s1 + $0x7d8] sm:$0xff]
    %v285 = vld [vmem:[%s1 + $0x7e0] sm:$0xff]
    %v286 = vld [vmem:[%s1 + $0x7e8] sm:$0xff]
    %v287 = vld [vmem:[%s1 + $0x7f0] sm:$0xff]
    %v288 = vld [vmem:[%s1 + $0x7f8] sm:$0xff]
    %v289 = vld [vmem:[%s1 + $0x800] sm:$0xff]
    %v290 = vld [vmem:[%s1 + $0x808] sm:$0xff]
    %v291 = vld [vmem:[%s1 + $0x810] sm:$0xff]
    %v292 = vld [vmem:[%s1 + $0x818] sm:$0xff]
    %v293 = vld [vmem:[%s1 + $0x820] sm:$0xff]
    %v294 = vld [vmem:[%s1 + $0x828] sm:$0xff]
    %v295 = vld [vmem:[%s1 + $0x830] sm:$0xff]
    %v296 = vld [vmem:[%s1 + $0x838] sm:$0xff]
    %v297 = vld [vmem:[%s1 + $0x840] sm:$0xff]
    %v298 = vld [vmem:[%s1 + $0x848] sm:$0xff]
    %v299 = vld [vmem:[%s1 + $0x850] sm:$0xff]
    %v300 = vld [vmem:[%s1 + $0x858] sm:$0xff]
    %v301 = vld [vmem:[%s1 + $0x860] sm:$0xff]
    %v302 = vld [vmem:[%s1 + $0x868] sm:$0xff]
    %v303 = vld [vmem:[%s1 + $0x870] sm:$0xff]
    %v304 = vld [vmem:[%s1 + $0x878] sm:$0xff]
    %v305 = vld [vmem:[%s1 + $0x880] sm:$0xff]
    %v306 = vld [vmem:[%s1 + $0x888] sm:$0xff]
    %v307 = vld [vmem:[%s1 + $0x890] sm:$0xff]
    %v308 = vld [vmem:[%s1 + $0x898] sm:$0xff]
    %v309 = vld [vmem:[%s1 + $0x8a0] sm:$0xff]
    %v310 = vld [vmem:[%s1 + $0x8a8] sm:$0xff]
    %v311 = vld [vmem:[%s1 + $0x8b0] sm:$0xff]
    %v312 = vld [vmem:[%s1 + $0x8b8] sm:$0xff]
    %v313 = vld [vmem:[%s1 + $0x8c0] sm:$0xff]
    %v314 = vld [vmem:[%s1 + $0x8c8] sm:$0xff]
    %v315 = vld [vmem:[%s1 + $0x8d0] sm:$0xff]
    %v316 = vld [vmem:[%s1 + $0x8d8] sm:$0xff]
    %v317 = vld [vmem:[%s1 + $0x8e0] sm:$0xff]
    %v318 = vld [vmem:[%s1 + $0x8e8] sm:$0xff]
    %v319 = vld [vmem:[%s1 + $0x8f0] sm:$0xff]
    %v320 = vld [vmem:[%s1 + $0x8f8] sm:$0xff]
    %v321 = vld [vmem:[%s1 + $0x900] sm:$0xff]
    %v322 = vld [vmem:[%s1 + $0x908] sm:$0xff]
    %v323 = vld [vmem:[%s1 + $0x910] sm:$0xff]
    %v324 = vld [vmem:[%s1 + $0x918] sm:$0xff]
    %v325 = vld [vmem:[%s1 + $0x920] sm:$0xff]
    %v326 = vld [vmem:[%s1 + $0x928] sm:$0xff]
    %v327 = vld [vmem:[%s1 + $0x930] sm:$0xff]
    %v328 = vld [vmem:[%s1 + $0x938] sm:$0xff]
    %v329 = vld [vmem:[%s1 + $0x940] sm:$0xff]
    %v330 = vld [vmem:[%s1 + $0x948] sm:$0xff]
    %v331 = vld [vmem:[%s1 + $0x950] sm:$0xff]
    %v332 = vld [vmem:[%s1 + $0x958] sm:$0xff]
    %v333 = vld [vmem:[%s1 + $0x960] sm:$0xff]
    %v334 = vld [vmem:[%s1 + $0x968] sm:$0xff]
    %v335 = vld [vmem:[%s1 + $0x970] sm:$0xff]
    %v336 = vld [vmem:[%s1 + $0x978] sm:$0xff]
    %v337 = vld [vmem:[%s1 + $0x980] sm:$0xff]
    %v338 = vld [vmem:[%s1 + $0x988] sm:$0xff]
    %v339 = vld [vmem:[%s1 + $0x990] sm:$0xff]
    %v340 = vld [vmem:[%s1 + $0x998] sm:$0xff]
    %v341 = vld [vmem:[%s1 + $0x9a0] sm:$0xff]
    %v342 = vld [vmem:[%s1 + $0x9a8] sm:$0xff]
    %v343 = vld [vmem:[%s1 + $0x9b0] sm:$0xff]
    %v344 = vld [vmem:[%s1 + $0x9b8] sm:$0xff]
    %v345 = vld [vmem:[%s1 + $0x9c0] sm:$0xff]
    %v346 = vld [vmem:[%s1 + $0x9c8] sm:$0xff]
    %v347 = vld [vmem:[%s1 + $0x9d0] sm:$0xff]
    %v348 = vld [vmem:[%s1 + $0x9d8] sm:$0xff]
    %v349 = vld [vmem:[%s1 + $0x9e0] sm:$0xff]
    %v350 = vld [vmem:[%s1 + $0x9e8] sm:$0xff]
    %v351 = vld [vmem:[%s1 + $0x9f0] sm:$0xff]
    %v352 = vld [vmem:[%s1 + $0x9f8] sm:$0xff]
    %v353 = vld [vmem:[%s1 + $0xa00] sm:$0xff]
    %v354 = vld [vmem:[%s1 + $0xa08] sm:$0xff]
    %v355 = vld [vmem:[%s1 + $0xa10] sm:$0xff]
    %v356 = vld [vmem:[%s1 + $0xa18] sm:$0xff]
    %v357 = vld [vmem:[%s1 + $0xa20] sm:$0xff]
    %v358 = vld [vmem:[%s1 + $0xa28] sm:$0xff]
    %v359 = vld [vmem:[%s1 + $0xa30] sm:$0xff]
    %v360 = vld [vmem:[%s1 + $0xa38] sm:$0xff]
    %v361 = vld [vmem:[%s1 + $0xa40] sm:$0xff]
    %v362 = vld [vmem:[%s1 + $0xa48] sm:$0xff]
    %v363 = vld [vmem:[%s1 + $0xa50] sm:$0xff]
    %v364 = vld [vmem:[%s1 + $0xa58] sm:$0xff]
    %v365 = vld [vmem:[%s1 + $0xa60] sm:$0xff]
    %v366 = vld [vmem:[%s1 + $0xa68] sm:$0xff]
    %v367 = vld [vmem:[%s1 + $0xa70] sm:$0xff]
    %v368 = vld [vmem:[%s1 + $0xa78] sm:$0xff]
    %v369 = vld [vmem:[%s1 + $0xa80] sm:$0xff]
    %v370 = vld [vmem:[%s1 + $0xa88] sm:$0xff]
    %v371 = vld [vmem:[%s1 + $0xa90] sm:$0xff]
    %v372 = vld [vmem:[%s1 + $0xa98] sm:$0xff]
    %v373 = vld [vmem:[%s1 + $0xaa0] sm:$0xff]
    %v374 = vld [vmem:[%s1 + $0xaa8] sm:$0xff]
    %v375 = vld [vmem:[%s1 + $0xab0] sm:$0xff]
    %v376 = vld [vmem:[%s1 + $0xab8] sm:$0xff]
    %v377 = vld [vmem:[%s1 + $0xac0] sm:$0xff]
    %v378 = vld [vmem:[%s1 + $0xac8] sm:$0xff]
    %v379 = vld [vmem:[%s1 + $0xad0] sm:$0xff]
    %v380 = vld [vmem:[%s1 + $0xad8] sm:$0xff]
    %v381 = vld [vmem:[%s1 + $0xae0] sm:$0xff]
    %v382 = vld [vmem:[%s1 + $0xae8] sm:$0xff]
    %v383 = vld [vmem:[%s1 + $0xaf0] sm:$0xff]
    %v384 = vld [vmem:[%s1 + $0xaf8] sm:$0xff]
    %v385 = vld [vmem:[%s1 + $0xb00] sm:$0xff]
    %v386 = vld [vmem:[%s1 + $0xb08] sm:$0xff]
    %v387 = vld [vmem:[%s1 + $0xb10] sm:$0xff]
    %v388 = vld [vmem:[%s1 + $0xb18] sm:$0xff]
    %v389 = vld [vmem:[%s1 + $0xb20] sm:$0xff]
    %v390 = vld [vmem:[%s1 + $0xb28] sm:$0xff]
    %v391 = vld [vmem:[%s1 + $0xb30] sm:$0xff]
    %v392 = vld [vmem:[%s1 + $0xb38] sm:$0xff]
    %v393 = vld [vmem:[%s1 + $0xb40] sm:$0xff]
    %v394 = vld [vmem:[%s1 + $0xb48] sm:$0xff]
    %v395 = vld [vmem:[%s1 + $0xb50] sm:$0xff]
    %v396 = vld [vmem:[%s1 + $0xb58] sm:$0xff]
    %v397 = vld [vmem:[%s1 + $0xb60] sm:$0xff]
    %v398 = vld [vmem:[%s1 + $0xb68] sm:$0xff]
    %v399 = vld [vmem:[%s1 + $0xb70] sm:$0xff]
    %v400 = vld [vmem:[%s1 + $0xb78] sm:$0xff]
    %v401 = vld [vmem:[%s1 + $0xb80] sm:$0xff]
    %v402 = vld [vmem:[%s1 + $0xb88] sm:$0xff]
    %v403 = vld [vmem:[%s1 + $0xb90] sm:$0xff]
    %v404 = vld [vmem:[%s1 + $0xb98] sm:$0xff]
    %v405 = vld [vmem:[%s1 + $0xba0] sm:$0xff]
    %v406 = vld [vmem:[%s1 + $0xba8] sm:$0xff]
    %v407 = vld [vmem:[%s1 + $0xbb0] sm:$0xff]
    %v408 = vld [vmem:[%s1 + $0xbb8] sm:$0xff]
    %v409 = vld [vmem:[%s1 + $0xbc0] sm:$0xff]
    %v410 = vld [vmem:[%s1 + $0xbc8] sm:$0xff]
    %v411 = vld [vmem:[%s1 + $0xbd0] sm:$0xff]
    %v412 = vld [vmem:[%s1 + $0xbd8] sm:$0xff]
    %v413 = vld [vmem:[%s1 + $0xbe0] sm:$0xff]
    %v414 = vld [vmem:[%s1 + $0xbe8] sm:$0xff]
    %v415 = vld [vmem:[%s1 + $0xbf0] sm:$0xff]
    %v416 = vld [vmem:[%s1 + $0xbf8] sm:$0xff]
    %v417 = vld [vmem:[%s1 + $0xc00] sm:$0xff]
    %v418 = vld [vmem:[%s1 + $0xc08] sm:$0xff]
    %v419 = vld [vmem:[%s1 + $0xc10] sm:$0xff]
    %v420 = vld [vmem:[%s1 + $0xc18] sm:$0xff]
    %v421 = vld [vmem:[%s1 + $0xc20] sm:$0xff]
    %v422 = vld [vmem:[%s1 + $0xc28] sm:$0xff]
    %v423 = vld [vmem:[%s1 + $0xc30] sm:$0xff]
    %v424 = vld [vmem:[%s1 + $0xc38] sm:$0xff]
    %v425 = vld [vmem:[%s1 + $0xc40] sm:$0xff]
    %v426 = vld [vmem:[%s1 + $0xc48] sm:$0xff]
    %v427 = vld [vmem:[%s1 + $0xc50] sm:$0xff]
    %v428 = vld [vmem:[%s1 + $0xc58] sm:$0xff]
    %v429 = vld [vmem:[%s1 + $0xc60] sm:$0xff]
    %v430 = vld [vmem:[%s1 + $0xc68] sm:$0xff]
    %v431 = vld [vmem:[%s1 + $0xc70] sm:$0xff]
    %v432 = vld [vmem:[%s1 + $0xc78] sm:$0xff]
    %v433 = vld [vmem:[%s1 + $0xc80] sm:$0xff]
    %v434 = vld [vmem:[%s1 + $0xc88] sm:$0xff]
    %v435 = vld [vmem:[%s1 + $0xc90] sm:$0xff]
    %v436 = vld [vmem:[%s1 + $0xc98] sm:$0xff]
    %v437 = vld [vmem:[%s1 + $0xca0] sm:$0xff]
    %v438 = vld [vmem:[%s1 + $0xca8] sm:$0xff]
    %v439 = vld [vmem:[%s1 + $0xcb0] sm:$0xff]
    %v440 = vld [vmem:[%s1 + $0xcb8] sm:$0xff]
    %v441 = vld [vmem:[%s1 + $0xcc0] sm:$0xff]
    %v442 = vld [vmem:[%s1 + $0xcc8] sm:$0xff]
    %v443 = vld [vmem:[%s1 + $0xcd0] sm:$0xff]
    %v444 = vld [vmem:[%s1 + $0xcd8] sm:$0xff]
    %v445 = vld [vmem:[%s1 + $0xce0] sm:$0xff]
    %v446 = vld [vmem:[%s1 + $0xce8] sm:$0xff]
    %v447 = vld [vmem:[%s1 + $0xcf0] sm:$0xff]
    %v448 = vld [vmem:[%s1 + $0xcf8] sm:$0xff]
    %v449 = vld [vmem:[%s1 + $0xd00] sm:$0xff]
    %v450 = vld [vmem:[%s1 + $0xd08] sm:$0xff]
    %v451 = vld [vmem:[%s1 + $0xd10] sm:$0xff]
    %v452 = vld [vmem:[%s1 + $0xd18] sm:$0xff]
    %v453 = vld [vmem:[%s1 + $0xd20] sm:$0xff]
    %v454 = vld [vmem:[%s1 + $0xd28] sm:$0xff]
    %v455 = vld [vmem:[%s1 + $0xd30] sm:$0xff]
    %v456 = vld [vmem:[%s1 + $0xd38] sm:$0xff]
    %v457 = vld [vmem:[%s1 + $0xd40] sm:$0xff]
    %v458 = vld [vmem:[%s1 + $0xd48] sm:$0xff]
    %v459 = vld [vmem:[%s1 + $0xd50] sm:$0xff]
    %v460 = vld [vmem:[%s1 + $0xd58] sm:$0xff]
    %v461 = vld [vmem:[%s1 + $0xd60] sm:$0xff]
    %v462 = vld [vmem:[%s1 + $0xd68] sm:$0xff]
    %v463 = vld [vmem:[%s1 + $0xd70] sm:$0xff]
    %v464 = vld [vmem:[%s1 + $0xd78] sm:$0xff]
    %v465 = vld [vmem:[%s1 + $0xd80] sm:$0xff]
    %v466 = vld [vmem:[%s1 + $0xd88] sm:$0xff]
    %v467 = vld [vmem:[%s1 + $0xd90] sm:$0xff]
    %v468 = vld [vmem:[%s1 + $0xd98] sm:$0xff]
    %v469 = vld [vmem:[%s1 + $0xda0] sm:$0xff]
    %v470 = vld [vmem:[%s1 + $0xda8] sm:$0xff]
    %v471 = vld [vmem:[%s1 + $0xdb0] sm:$0xff]
    %v472 = vld [vmem:[%s1 + $0xdb8] sm:$0xff]
    %v473 = vld [vmem:[%s1 + $0xdc0] sm:$0xff]
    %v474 = vld [vmem:[%s1 + $0xdc8] sm:$0xff]
    %v475 = vld [vmem:[%s1 + $0xdd0] sm:$0xff]
    %v476 = vld [vmem:[%s1 + $0xdd8] sm:$0xff]
    %v477 = vld [vmem:[%s1 + $0xde0] sm:$0xff]
    %v478 = vld [vmem:[%s1 + $0xde8] sm:$0xff]
    %v479 = vld [vmem:[%s1 + $0xdf0] sm:$0xff]
    %v480 = vld [vmem:[%s1 + $0xdf8] sm:$0xff]
    %v481 = vld [vmem:[%s1 + $0xe00] sm:$0xff]
    %v482 = vld [vmem:[%s1 + $0xe08] sm:$0xff]
    %v483 = vld [vmem:[%s1 + $0xe10] sm:$0xff]
    %v484 = vld [vmem:[%s1 + $0xe18] sm:$0xff]
    %v485 = vld [vmem:[%s1 + $0xe20] sm:$0xff]
    %v486 = vld [vmem:[%s1 + $0xe28] sm:$0xff]
    %v487 = vld [vmem:[%s1 + $0xe30] sm:$0xff]
    %v488 = vld [vmem:[%s1 + $0xe38] sm:$0xff]
    %v489 = vld [vmem:[%s1 + $0xe40] sm:$0xff]
    %v490 = vld [vmem:[%s1 + $0xe48] sm:$0xff]
    %v491 = vld [vmem:[%s1 + $0xe50] sm:$0xff]
    %v492 = vld [vmem:[%s1 + $0xe58] sm:$0xff]
    %v493 = vld [vmem:[%s1 + $0xe60] sm:$0xff]
    %v494 = vld [vmem:[%s1 + $0xe68] sm:$0xff]
    %v495 = vld [vmem:[%s1 + $0xe70] sm:$0xff]
    %v496 = vld [vmem:[%s1 + $0xe78] sm:$0xff]
    %v497 = vld [vmem:[%s1 + $0xe80] sm:$0xff]
    %v498 = vld [vmem:[%s1 + $0xe88] sm:$0xff]
    %v499 = vld [vmem:[%s1 + $0xe90] sm:$0xff]
    %v500 = vld [vmem:[%s1 + $0xe98] sm:$0xff]
    %v501 = vld [vmem:[%s1 + $0xea0] sm:$0xff]
    %v502 = vld [vmem:[%s1 + $0xea8] sm:$0xff]
    %v503 = vld [vmem:[%s1 + $0xeb0] sm:$0xff]
    %v504 = vld [vmem:[%s1 + $0xeb8] sm:$0xff]
    %v505 = vld [vmem:[%s1 + $0xec0] sm:$0xff]
    %v506 = vld [vmem:[%s1 + $0xec8] sm:$0xff]
    %v507 = vld [vmem:[%s1 + $0xed0] sm:$0xff]
    %v508 = vld [vmem:[%s1 + $0xed8] sm:$0xff]
    %v509 = vld [vmem:[%s1 + $0xee0] sm:$0xff]
    %v510 = vld [vmem:[%s1 + $0xee8] sm:$0xff]
    %v511 = vld [vmem:[%s1 + $0xef0] sm:$0xff]
    %v512 = vld [vmem:[%s1 + $0xef8] sm:$0xff]
    %v513 = vld [vmem:[%s2] sm:$0x1f]
    %v515 = vlaneseq
    %v516 = vshrl.u32 %v515, 7
    %v517 = vsub.s32 0, %v516
    %v518 = vrot.slane %v513, %v517
    %v519 = vlaneseq
    %v520 = vshrl.u32 %v519, 7
    %v521 = vsub.s32 1, %v520
    %v522 = vrot.slane %v513, %v521
    %v523 = vlaneseq
    %v524 = vshrl.u32 %v523, 7
    %v525 = vsub.s32 2, %v524
    %v526 = vrot.slane %v513, %v525
    %v527 = vlaneseq
    %v528 = vshrl.u32 %v527, 7
    %v529 = vsub.s32 3, %v528
    %v530 = vrot.slane %v513, %v529
    %v531 = vlaneseq
    %v532 = vshrl.u32 %v531, 7
    %v533 = vsub.s32 4, %v532
    %v534 = vrot.slane %v513, %v533
    %v546 = vcombine.low %v27, %v30
    %v547 = vcombine.high %v27, %v30
    %v548 = vcombine.low %v28, %v31
    %v549 = vcombine.high %v28, %v31
    %v550 = vcombine.low %v29, %v32
    %v551 = vcombine.high %v29, %v32
    %558 = vmatprep.subr.mxu0 %v34
    %559 = vmatpush1.msra.mxu0 %v33
    %560 = vmatprep.subr.mxu0 %v39
    %561 = vmatpush1.msra.mxu0 %v38
    %562 = vmatprep.subr.mxu0 %v44
    %563 = vmatpush1.msra.mxu0 %v43
    %564 = vmatprep.subr.mxu0 %v49
    %565 = vmatpush1.msra.mxu0 %v48
    %566 = vmatprep.subr.mxu0 %v54
    %567 = vmatpush1.msra.mxu0 %v53
    %568 = vmatprep.subr.mxu0 %v59
    %569 = vmatpush1.msra.mxu0 %v58
    %570 = vmatprep.subr.mxu0 %v64
    %571 = vmatpush1.msra.mxu0 %v63
    %572 = vmatprep.subr.mxu0 %v69
    %573 = vmatpush1.msra.mxu0 %v68
    %574 = vmatprep.subr.mxu0 %v74
    %575 = vmatpush1.msra.mxu0 %v73
    %576 = vmatprep.subr.mxu0 %v79
    %577 = vmatpush1.msra.mxu0 %v78
    %578 = vmatprep.subr.mxu0 %v84
    %579 = vmatpush1.msra.mxu0 %v83
    %580 = vmatprep.subr.mxu0 %v89
    %581 = vmatpush1.msra.mxu0 %v88
    %582 = vmatprep.subr.mxu0 %v94
    %583 = vmatpush1.msra.mxu0 %v93
    %584 = vmatprep.subr.mxu0 %v99
    %585 = vmatpush1.msra.mxu0 %v98
    %586 = vmatprep.subr.mxu0 %v104
    %587 = vmatpush1.msra.mxu0 %v103
    %588 = vmatprep.subr.mxu0 %v109
    %589 = vmatpush1.msra.mxu0 %v108
    %590 = vmatprep.subr.mxu0 %v114
    %591 = vmatpush1.msra.mxu0 %v113
    %592 = vmatprep.subr.mxu0 %v119
    %593 = vmatpush1.msra.mxu0 %v118
    %594 = vmatprep.subr.mxu0 %v124
    %595 = vmatpush1.msra.mxu0 %v123
    %596 = vmatprep.subr.mxu0 %v129
    %597 = vmatpush1.msra.mxu0 %v128
    %598 = vmatprep.subr.mxu0 %v134
    %599 = vmatpush1.msra.mxu0 %v133
    %600 = vmatprep.subr.mxu0 %v139
    %601 = vmatpush1.msra.mxu0 %v138
    %602 = vmatprep.subr.mxu0 %v144
    %603 = vmatpush1.msra.mxu0 %v143
    %604 = vmatprep.subr.mxu0 %v149
    %605 = vmatpush1.msra.mxu0 %v148
    %606 = vmatprep.subr.mxu0 %v154
    %607 = vmatpush1.msra.mxu0 %v153
    %608 = vmatprep.subr.mxu0 %v159
    %609 = vmatpush1.msra.mxu0 %v158
    %610 = vmatprep.subr.mxu0 %v164
    %611 = vmatpush1.msra.mxu0 %v163
    %612 = vmatprep.subr.mxu0 %v169
    %613 = vmatpush1.msra.mxu0 %v168
    %614 = vmatprep.subr.mxu0 %v174
    %615 = vmatpush1.msra.mxu0 %v173
    %616 = vmatprep.subr.mxu0 %v179
    %617 = vmatpush1.msra.mxu0 %v178
    %618 = vmatprep.subr.mxu0 %v184
    %619 = vmatpush1.msra.mxu0 %v183
    %620 = vmatprep.subr.mxu0 %v189
    %621 = vmatpush1.msra.mxu0 %v188
    %622 = vmatprep.mubr.f32.mxu0 %v547
    %623 = vmatmul.mubr.f32.gmra.mrb[0].mxu0 %v546
    %v624 = vpop.f32.mrb[0].mxu0
    %v625 = vadd.f32 %v518, %v624
    %v626 = vpop.f32.mrb[0].mxu0
    %v627 = vadd.f32 %v522, %v626
    %628 = vdwg.mxu0
    %629 = vmatprep.subr.mxu0 %v194
    %630 = vmatpush1.msra.mxu0 %v193
    %631 = vmatprep.subr.mxu0 %v199
    %632 = vmatpush1.msra.mxu0 %v198
    %633 = vmatprep.subr.mxu0 %v204
    %634 = vmatpush1.msra.mxu0 %v203
    %635 = vmatprep.subr.mxu0 %v209
    %636 = vmatpush1.msra.mxu0 %v208
    %637 = vmatprep.subr.mxu0 %v214
    %638 = vmatpush1.msra.mxu0 %v213
    %639 = vmatprep.subr.mxu0 %v219
    %640 = vmatpush1.msra.mxu0 %v218
    %641 = vmatprep.subr.mxu0 %v224
    %642 = vmatpush1.msra.mxu0 %v223
    %643 = vmatprep.subr.mxu0 %v229
    %644 = vmatpush1.msra.mxu0 %v228
    %645 = vmatprep.subr.mxu0 %v234
    %646 = vmatpush1.msra.mxu0 %v233
    %647 = vmatprep.subr.mxu0 %v239
    %648 = vmatpush1.msra.mxu0 %v238
    %649 = vmatprep.subr.mxu0 %v244
    %650 = vmatpush1.msra.mxu0 %v243
    %651 = vmatprep.subr.mxu0 %v249
    %652 = vmatpush1.msra.mxu0 %v248
    %653 = vmatprep.subr.mxu0 %v254
    %654 = vmatpush1.msra.mxu0 %v253
    %655 = vmatprep.subr.mxu0 %v259
    %656 = vmatpush1.msra.mxu0 %v258
    %657 = vmatprep.subr.mxu0 %v264
    %658 = vmatpush1.msra.mxu0 %v263
    %659 = vmatprep.subr.mxu0 %v269
    %660 = vmatpush1.msra.mxu0 %v268
    %661 = vmatprep.subr.mxu0 %v274
    %662 = vmatpush1.msra.mxu0 %v273
    %663 = vmatprep.subr.mxu0 %v279
    %664 = vmatpush1.msra.mxu0 %v278
    %665 = vmatprep.subr.mxu0 %v284
    %666 = vmatpush1.msra.mxu0 %v283
    %667 = vmatprep.subr.mxu0 %v289
    %668 = vmatpush1.msra.mxu0 %v288
    %669 = vmatprep.subr.mxu0 %v294
    %670 = vmatpush1.msra.mxu0 %v293
    %671 = vmatprep.subr.mxu0 %v299
    %672 = vmatpush1.msra.mxu0 %v298
    %673 = vmatprep.subr.mxu0 %v304
    %674 = vmatpush1.msra.mxu0 %v303
    %675 = vmatprep.subr.mxu0 %v309
    %676 = vmatpush1.msra.mxu0 %v308
    %677 = vmatprep.subr.mxu0 %v314
    %678 = vmatpush1.msra.mxu0 %v313
    %679 = vmatprep.subr.mxu0 %v319
    %680 = vmatpush1.msra.mxu0 %v318
    %681 = vmatprep.subr.mxu0 %v324
    %682 = vmatpush1.msra.mxu0 %v323
    %683 = vmatprep.subr.mxu0 %v329
    %684 = vmatpush1.msra.mxu0 %v328
    %685 = vmatprep.subr.mxu0 %v334
    %686 = vmatpush1.msra.mxu0 %v333
    %687 = vmatprep.subr.mxu0 %v339
    %688 = vmatpush1.msra.mxu0 %v338
    %689 = vmatprep.subr.mxu0 %v344
    %690 = vmatpush1.msra.mxu0 %v343
    %691 = vmatprep.subr.mxu0 %v349
    %692 = vmatpush1.msra.mxu0 %v348
    %693 = vmatprep.mubr.f32.mxu0 %v549
    %694 = vmatmul.mubr.f32.gmra.mrb[0].mxu0 %v548
    %v695 = vpop.f32.mrb[0].mxu0
    %v696 = vadd.f32 %v625, %v695
    %v697 = vpop.f32.mrb[0].mxu0
    %v698 = vadd.f32 %v627, %v697
    %699 = vdwg.mxu0
    %700 = vmatprep.subr.mxu0 %v354
    %701 = vmatpush1.msra.mxu0 %v353
    %702 = vmatprep.subr.mxu0 %v359
    %703 = vmatpush1.msra.mxu0 %v358
    %704 = vmatprep.subr.mxu0 %v364
    %705 = vmatpush1.msra.mxu0 %v363
    %706 = vmatprep.subr.mxu0 %v369
    %707 = vmatpush1.msra.mxu0 %v368
    %708 = vmatprep.subr.mxu0 %v374
    %709 = vmatpush1.msra.mxu0 %v373
    %710 = vmatprep.subr.mxu0 %v379
    %711 = vmatpush1.msra.mxu0 %v378
    %712 = vmatprep.subr.mxu0 %v384
    %713 = vmatpush1.msra.mxu0 %v383
    %714 = vmatprep.subr.mxu0 %v389
    %715 = vmatpush1.msra.mxu0 %v388
    %716 = vmatprep.subr.mxu0 %v394
    %717 = vmatpush1.msra.mxu0 %v393
    %718 = vmatprep.subr.mxu0 %v399
    %719 = vmatpush1.msra.mxu0 %v398
    %720 = vmatprep.subr.mxu0 %v404
    %721 = vmatpush1.msra.mxu0 %v403
    %722 = vmatprep.subr.mxu0 %v409
    %723 = vmatpush1.msra.mxu0 %v408
    %724 = vmatprep.subr.mxu0 %v414
    %725 = vmatpush1.msra.mxu0 %v413
    %726 = vmatprep.subr.mxu0 %v419
    %727 = vmatpush1.msra.mxu0 %v418
    %728 = vmatprep.subr.mxu0 %v424
    %729 = vmatpush1.msra.mxu0 %v423
    %730 = vmatprep.subr.mxu0 %v429
    %731 = vmatpush1.msra.mxu0 %v428
    %732 = vmatprep.subr.mxu0 %v434
    %733 = vmatpush1.msra.mxu0 %v433
    %734 = vmatprep.subr.mxu0 %v439
    %735 = vmatpush1.msra.mxu0 %v438
    %736 = vmatprep.subr.mxu0 %v444
    %737 = vmatpush1.msra.mxu0 %v443
    %738 = vmatprep.subr.mxu0 %v449
    %739 = vmatpush1.msra.mxu0 %v448
    %740 = vmatprep.subr.mxu0 %v454
    %741 = vmatpush1.msra.mxu0 %v453
    %742 = vmatprep.subr.mxu0 %v459
    %743 = vmatpush1.msra.mxu0 %v458
    %744 = vmatprep.subr.mxu0 %v464
    %745 = vmatpush1.msra.mxu0 %v463
    %746 = vmatprep.subr.mxu0 %v469
    %747 = vmatpush1.msra.mxu0 %v468
    %748 = vmatprep.subr.mxu0 %v474
    %749 = vmatpush1.msra.mxu0 %v473
    %750 = vmatprep.subr.mxu0 %v479
    %751 = vmatpush1.msra.mxu0 %v478
    %752 = vmatprep.subr.mxu0 %v484
    %753 = vmatpush1.msra.mxu0 %v483
    %754 = vmatprep.subr.mxu0 %v489
    %755 = vmatpush1.msra.mxu0 %v488
    %756 = vmatprep.subr.mxu0 %v494
    %757 = vmatpush1.msra.mxu0 %v493
    %758 = vmatprep.subr.mxu0 %v499
    %759 = vmatpush1.msra.mxu0 %v498
    %760 = vmatprep.subr.mxu0 %v504
    %761 = vmatpush1.msra.mxu0 %v503
    %762 = vmatprep.subr.mxu0 %v509
    %763 = vmatpush1.msra.mxu0 %v508
    %764 = vmatprep.mubr.f32.mxu0 %v551
    %765 = vmatmul.mubr.f32.gmra.mrb[0].mxu0 %v550
    %v766 = vpop.f32.mrb[0].mxu0
    %v767 = vadd.f32 %v696, %v766
    %v768 = vpop.f32.mrb[0].mxu0
    %v769 = vadd.f32 %v698, %v768
    %770 = vdwg.mxu0
    %771 = vmatprep.subr.mxu0 %v36
    %772 = vmatpush1.msra.mxu0 %v35
    %773 = vmatprep.subr.mxu0 %v41
    %774 = vmatpush1.msra.mxu0 %v40
    %775 = vmatprep.subr.mxu0 %v46
    %776 = vmatpush1.msra.mxu0 %v45
    %777 = vmatprep.subr.mxu0 %v51
    %778 = vmatpush1.msra.mxu0 %v50
    %779 = vmatprep.subr.mxu0 %v56
    %780 = vmatpush1.msra.mxu0 %v55
    %781 = vmatprep.subr.mxu0 %v61
    %782 = vmatpush1.msra.mxu0 %v60
    %783 = vmatprep.subr.mxu0 %v66
    %784 = vmatpush1.msra.mxu0 %v65
    %785 = vmatprep.subr.mxu0 %v71
    %786 = vmatpush1.msra.mxu0 %v70
    %787 = vmatprep.subr.mxu0 %v76
    %788 = vmatpush1.msra.mxu0 %v75
    %789 = vmatprep.subr.mxu0 %v81
    %790 = vmatpush1.msra.mxu0 %v80
    %791 = vmatprep.subr.mxu0 %v86
    %792 = vmatpush1.msra.mxu0 %v85
    %793 = vmatprep.subr.mxu0 %v91
    %794 = vmatpush1.msra.mxu0 %v90
    %795 = vmatprep.subr.mxu0 %v96
    %796 = vmatpush1.msra.mxu0 %v95
    %797 = vmatprep.subr.mxu0 %v101
    %798 = vmatpush1.msra.mxu0 %v100
    %799 = vmatprep.subr.mxu0 %v106
    %800 = vmatpush1.msra.mxu0 %v105
    %801 = vmatprep.subr.mxu0 %v111
    %802 = vmatpush1.msra.mxu0 %v110
    %803 = vmatprep.subr.mxu0 %v116
    %804 = vmatpush1.msra.mxu0 %v115
    %805 = vmatprep.subr.mxu0 %v121
    %806 = vmatpush1.msra.mxu0 %v120
    %807 = vmatprep.subr.mxu0 %v126
    %808 = vmatpush1.msra.mxu0 %v125
    %809 = vmatprep.subr.mxu0 %v131
    %810 = vmatpush1.msra.mxu0 %v130
    %811 = vmatprep.subr.mxu0 %v136
    %812 = vmatpush1.msra.mxu0 %v135
    %813 = vmatprep.subr.mxu0 %v141
    %814 = vmatpush1.msra.mxu0 %v140
    %815 = vmatprep.subr.mxu0 %v146
    %816 = vmatpush1.msra.mxu0 %v145
    %817 = vmatprep.subr.mxu0 %v151
    %818 = vmatpush1.msra.mxu0 %v150
    %819 = vmatprep.subr.mxu0 %v156
    %820 = vmatpush1.msra.mxu0 %v155
    %821 = vmatprep.subr.mxu0 %v161
    %822 = vmatpush1.msra.mxu0 %v160
    %823 = vmatprep.subr.mxu0 %v166
    %824 = vmatpush1.msra.mxu0 %v165
    %825 = vmatprep.subr.mxu0 %v171
    %826 = vmatpush1.msra.mxu0 %v170
    %827 = vmatprep.subr.mxu0 %v176
    %828 = vmatpush1.msra.mxu0 %v175
    %829 = vmatprep.subr.mxu0 %v181
    %830 = vmatpush1.msra.mxu0 %v180
    %831 = vmatprep.subr.mxu0 %v186
    %832 = vmatpush1.msra.mxu0 %v185
    %833 = vmatprep.subr.mxu0 %v191
    %834 = vmatpush1.msra.mxu0 %v190
    %835 = vmatprep.mubr.f32.mxu0 %v547
    %836 = vmatmul.mubr.f32.gmra.mrb[0].mxu0 %v546
    %v837 = vpop.f32.mrb[0].mxu0
    %v838 = vadd.f32 %v526, %v837
    %v839 = vpop.f32.mrb[0].mxu0
    %v840 = vadd.f32 %v530, %v839
    %841 = vdwg.mxu0
    %842 = vmatprep.subr.mxu0 %v196
    %843 = vmatpush1.msra.mxu0 %v195
    %844 = vmatprep.subr.mxu0 %v201
    %845 = vmatpush1.msra.mxu0 %v200
    %846 = vmatprep.subr.mxu0 %v206
    %847 = vmatpush1.msra.mxu0 %v205
    %848 = vmatprep.subr.mxu0 %v211
    %849 = vmatpush1.msra.mxu0 %v210
    %850 = vmatprep.subr.mxu0 %v216
    %851 = vmatpush1.msra.mxu0 %v215
    %852 = vmatprep.subr.mxu0 %v221
    %853 = vmatpush1.msra.mxu0 %v220
    %854 = vmatprep.subr.mxu0 %v226
    %855 = vmatpush1.msra.mxu0 %v225
    %856 = vmatprep.subr.mxu0 %v231
    %857 = vmatpush1.msra.mxu0 %v230
    %858 = vmatprep.subr.mxu0 %v236
    %859 = vmatpush1.msra.mxu0 %v235
    %860 = vmatprep.subr.mxu0 %v241
    %861 = vmatpush1.msra.mxu0 %v240
    %862 = vmatprep.subr.mxu0 %v246
    %863 = vmatpush1.msra.mxu0 %v245
    %864 = vmatprep.subr.mxu0 %v251
    %865 = vmatpush1.msra.mxu0 %v250
    %866 = vmatprep.subr.mxu0 %v256
    %867 = vmatpush1.msra.mxu0 %v255
    %868 = vmatprep.subr.mxu0 %v261
    %869 = vmatpush1.msra.mxu0 %v260
    %870 = vmatprep.subr.mxu0 %v266
    %871 = vmatpush1.msra.mxu0 %v265
    %872 = vmatprep.subr.mxu0 %v271
    %873 = vmatpush1.msra.mxu0 %v270
    %874 = vmatprep.subr.mxu0 %v276
    %875 = vmatpush1.msra.mxu0 %v275
    %876 = vmatprep.subr.mxu0 %v281
    %877 = vmatpush1.msra.mxu0 %v280
    %878 = vmatprep.subr.mxu0 %v286
    %879 = vmatpush1.msra.mxu0 %v285
    %880 = vmatprep.subr.mxu0 %v291
    %881 = vmatpush1.msra.mxu0 %v290
    %882 = vmatprep.subr.mxu0 %v296
    %883 = vmatpush1.msra.mxu0 %v295
    %884 = vmatprep.subr.mxu0 %v301
    %885 = vmatpush1.msra.mxu0 %v300
    %886 = vmatprep.subr.mxu0 %v306
    %887 = vmatpush1.msra.mxu0 %v305
    %888 = vmatprep.subr.mxu0 %v311
    %889 = vmatpush1.msra.mxu0 %v310
    %890 = vmatprep.subr.mxu0 %v316
    %891 = vmatpush1.msra.mxu0 %v315
    %892 = vmatprep.subr.mxu0 %v321
    %893 = vmatpush1.msra.mxu0 %v320
    %894 = vmatprep.subr.mxu0 %v326
    %895 = vmatpush1.msra.mxu0 %v325
    %896 = vmatprep.subr.mxu0 %v331
    %897 = vmatpush1.msra.mxu0 %v330
    %898 = vmatprep.subr.mxu0 %v336
    %899 = vmatpush1.msra.mxu0 %v335
    %900 = vmatprep.subr.mxu0 %v341
    %901 = vmatpush1.msra.mxu0 %v340
    %902 = vmatprep.subr.mxu0 %v346
    %903 = vmatpush1.msra.mxu0 %v345
    %904 = vmatprep.subr.mxu0 %v351
    %905 = vmatpush1.msra.mxu0 %v350
    %906 = vmatprep.mubr.f32.mxu0 %v549
    %907 = vmatmul.mubr.f32.gmra.mrb[0].mxu0 %v548
    %v908 = vpop.f32.mrb[0].mxu0
    %v909 = vadd.f32 %v838, %v908
    %v910 = vpop.f32.mrb[0].mxu0
    %v911 = vadd.f32 %v840, %v910
    %912 = vdwg.mxu0
    %913 = vmatprep.subr.mxu0 %v356
    %914 = vmatpush1.msra.mxu0 %v355
    %915 = vmatprep.subr.mxu0 %v361
    %916 = vmatpush1.msra.mxu0 %v360
    %917 = vmatprep.subr.mxu0 %v366
    %918 = vmatpush1.msra.mxu0 %v365
    %919 = vmatprep.subr.mxu0 %v371
    %920 = vmatpush1.msra.mxu0 %v370
    %921 = vmatprep.subr.mxu0 %v376
    %922 = vmatpush1.msra.mxu0 %v375
    %923 = vmatprep.subr.mxu0 %v381
    %924 = vmatpush1.msra.mxu0 %v380
    %925 = vmatprep.subr.mxu0 %v386
    %926 = vmatpush1.msra.mxu0 %v385
    %927 = vmatprep.subr.mxu0 %v391
    %928 = vmatpush1.msra.mxu0 %v390
    %929 = vmatprep.subr.mxu0 %v396
    %930 = vmatpush1.msra.mxu0 %v395
    %931 = vmatprep.subr.mxu0 %v401
    %932 = vmatpush1.msra.mxu0 %v400
    %933 = vmatprep.subr.mxu0 %v406
    %934 = vmatpush1.msra.mxu0 %v405
    %935 = vmatprep.subr.mxu0 %v411
    %936 = vmatpush1.msra.mxu0 %v410
    %937 = vmatprep.subr.mxu0 %v416
    %938 = vmatpush1.msra.mxu0 %v415
    %939 = vmatprep.subr.mxu0 %v421
    %940 = vmatpush1.msra.mxu0 %v420
    %941 = vmatprep.subr.mxu0 %v426
    %942 = vmatpush1.msra.mxu0 %v425
    %943 = vmatprep.subr.mxu0 %v431
    %944 = vmatpush1.msra.mxu0 %v430
    %945 = vmatprep.subr.mxu0 %v436
    %946 = vmatpush1.msra.mxu0 %v435
    %947 = vmatprep.subr.mxu0 %v441
    %948 = vmatpush1.msra.mxu0 %v440
    %949 = vmatprep.subr.mxu0 %v446
    %950 = vmatpush1.msra.mxu0 %v445
    %951 = vmatprep.subr.mxu0 %v451
    %952 = vmatpush1.msra.mxu0 %v450
    %953 = vmatprep.subr.mxu0 %v456
    %954 = vmatpush1.msra.mxu0 %v455
    %955 = vmatprep.subr.mxu0 %v461
    %956 = vmatpush1.msra.mxu0 %v460
    %957 = vmatprep.subr.mxu0 %v466
    %958 = vmatpush1.msra.mxu0 %v465
    %959 = vmatprep.subr.mxu0 %v471
    %960 = vmatpush1.msra.mxu0 %v470
    %961 = vmatprep.subr.mxu0 %v476
    %962 = vmatpush1.msra.mxu0 %v475
    %963 = vmatprep.subr.mxu0 %v481
    %964 = vmatpush1.msra.mxu0 %v480
    %965 = vmatprep.subr.mxu0 %v486
    %966 = vmatpush1.msra.mxu0 %v485
    %967 = vmatprep.subr.mxu0 %v491
    %968 = vmatpush1.msra.mxu0 %v490
    %969 = vmatprep.subr.mxu0 %v496
    %970 = vmatpush1.msra.mxu0 %v495
    %971 = vmatprep.subr.mxu0 %v501
    %972 = vmatpush1.msra.mxu0 %v500
    %973 = vmatprep.subr.mxu0 %v506
    %974 = vmatpush1.msra.mxu0 %v505
    %975 = vmatprep.subr.mxu0 %v511
    %976 = vmatpush1.msra.mxu0 %v510
    %977 = vmatprep.mubr.f32.mxu0 %v551
    %978 = vmatmul.mubr.f32.gmra.mrb[0].mxu0 %v550
    %v979 = vpop.f32.mrb[0].mxu0
    %v980 = vadd.f32 %v909, %v979
    %v981 = vpop.f32.mrb[0].mxu0
    %v982 = vadd.f32 %v911, %v981
    %983 = vdwg.mxu0
    %984 = vmatprep.subr.mxu0 0.0
    %985 = vmatpush1.msra.mxu0 %v37
    %986 = vmatprep.subr.mxu0 0.0
    %987 = vmatpush1.msra.mxu0 %v42
    %988 = vmatprep.subr.mxu0 0.0
    %989 = vmatpush1.msra.mxu0 %v47
    %990 = vmatprep.subr.mxu0 0.0
    %991 = vmatpush1.msra.mxu0 %v52
    %992 = vmatprep.subr.mxu0 0.0
    %993 = vmatpush1.msra.mxu0 %v57
    %994 = vmatprep.subr.mxu0 0.0
    %995 = vmatpush1.msra.mxu0 %v62
    %996 = vmatprep.subr.mxu0 0.0
    %997 = vmatpush1.msra.mxu0 %v67
    %998 = vmatprep.subr.mxu0 0.0
    %999 = vmatpush1.msra.mxu0 %v72
    %1000 = vmatprep.subr.mxu0 0.0
    %1001 = vmatpush1.msra.mxu0 %v77
    %1002 = vmatprep.subr.mxu0 0.0
    %1003 = vmatpush1.msra.mxu0 %v82
    %1004 = vmatprep.subr.mxu0 0.0
    %1005 = vmatpush1.msra.mxu0 %v87
    %1006 = vmatprep.subr.mxu0 0.0
    %1007 = vmatpush1.msra.mxu0 %v92
    %1008 = vmatprep.subr.mxu0 0.0
    %1009 = vmatpush1.msra.mxu0 %v97
    %1010 = vmatprep.subr.mxu0 0.0
    %1011 = vmatpush1.msra.mxu0 %v102
    %1012 = vmatprep.subr.mxu0 0.0
    %1013 = vmatpush1.msra.mxu0 %v107
    %1014 = vmatprep.subr.mxu0 0.0
    %1015 = vmatpush1.msra.mxu0 %v112
    %1016 = vmatprep.subr.mxu0 0.0
    %1017 = vmatpush1.msra.mxu0 %v117
    %1018 = vmatprep.subr.mxu0 0.0
    %1019 = vmatpush1.msra.mxu0 %v122
    %1020 = vmatprep.subr.mxu0 0.0
    %1021 = vmatpush1.msra.mxu0 %v127
    %1022 = vmatprep.subr.mxu0 0.0
    %1023 = vmatpush1.msra.mxu0 %v132
    %1024 = vmatprep.subr.mxu0 0.0
    %1025 = vmatpush1.msra.mxu0 %v137
    %1026 = vmatprep.subr.mxu0 0.0
    %1027 = vmatpush1.msra.mxu0 %v142
    %1028 = vmatprep.subr.mxu0 0.0
    %1029 = vmatpush1.msra.mxu0 %v147
    %1030 = vmatprep.subr.mxu0 0.0
    %1031 = vmatpush1.msra.mxu0 %v152
    %1032 = vmatprep.subr.mxu0 0.0
    %1033 = vmatpush1.msra.mxu0 %v157
    %1034 = vmatprep.subr.mxu0 0.0
    %1035 = vmatpush1.msra.mxu0 %v162
    %1036 = vmatprep.subr.mxu0 0.0
    %1037 = vmatpush1.msra.mxu0 %v167
    %1038 = vmatprep.subr.mxu0 0.0
    %1039 = vmatpush1.msra.mxu0 %v172
    %1040 = vmatprep.subr.mxu0 0.0
    %1041 = vmatpush1.msra.mxu0 %v177
    %1042 = vmatprep.subr.mxu0 0.0
    %1043 = vmatpush1.msra.mxu0 %v182
    %1044 = vmatprep.subr.mxu0 0.0
    %1045 = vmatpush1.msra.mxu0 %v187
    %1046 = vmatprep.subr.mxu0 0.0
    %1047 = vmatpush1.msra.mxu0 %v192
    %1048 = vmatprep.mubr.f32.mxu0 %v547
    %1049 = vmatmul.mubr.f32.gmra.mrb[0].mxu0 %v546
    %v1050 = vpop.f32.mrb[0].mxu0
    %v1051 = vadd.f32 %v534, %v1050
    %v1052 = vpop.f32.mrb[0].mxu0
    %1053 = vdwg.mxu0
    %1054 = vmatprep.subr.mxu0 0.0
    %1055 = vmatpush1.msra.mxu0 %v197
    %1056 = vmatprep.subr.mxu0 0.0
    %1057 = vmatpush1.msra.mxu0 %v202
    %1058 = vmatprep.subr.mxu0 0.0
    %1059 = vmatpush1.msra.mxu0 %v207
    %1060 = vmatprep.subr.mxu0 0.0
    %1061 = vmatpush1.msra.mxu0 %v212
    %1062 = vmatprep.subr.mxu0 0.0
    %1063 = vmatpush1.msra.mxu0 %v217
    %1064 = vmatprep.subr.mxu0 0.0
    %1065 = vmatpush1.msra.mxu0 %v222
    %1066 = vmatprep.subr.mxu0 0.0
    %1067 = vmatpush1.msra.mxu0 %v227
    %1068 = vmatprep.subr.mxu0 0.0
    %1069 = vmatpush1.msra.mxu0 %v232
    %1070 = vmatprep.subr.mxu0 0.0
    %1071 = vmatpush1.msra.mxu0 %v237
    %1072 = vmatprep.subr.mxu0 0.0
    %1073 = vmatpush1.msra.mxu0 %v242
    %1074 = vmatprep.subr.mxu0 0.0
    %1075 = vmatpush1.msra.mxu0 %v247
    %1076 = vmatprep.subr.mxu0 0.0
    %1077 = vmatpush1.msra.mxu0 %v252
    %1078 = vmatprep.subr.mxu0 0.0
    %1079 = vmatpush1.msra.mxu0 %v257
    %1080 = vmatprep.subr.mxu0 0.0
    %1081 = vmatpush1.msra.mxu0 %v262
    %1082 = vmatprep.subr.mxu0 0.0
    %1083 = vmatpush1.msra.mxu0 %v267
    %1084 = vmatprep.subr.mxu0 0.0
    %1085 = vmatpush1.msra.mxu0 %v272
    %1086 = vmatprep.subr.mxu0 0.0
    %1087 = vmatpush1.msra.mxu0 %v277
    %1088 = vmatprep.subr.mxu0 0.0
    %1089 = vmatpush1.msra.mxu0 %v282
    %1090 = vmatprep.subr.mxu0 0.0
    %1091 = vmatpush1.msra.mxu0 %v287
    %1092 = vmatprep.subr.mxu0 0.0
    %1093 = vmatpush1.msra.mxu0 %v292
    %1094 = vmatprep.subr.mxu0 0.0
    %1095 = vmatpush1.msra.mxu0 %v297
    %1096 = vmatprep.subr.mxu0 0.0
    %1097 = vmatpush1.msra.mxu0 %v302
    %1098 = vmatprep.subr.mxu0 0.0
    %1099 = vmatpush1.msra.mxu0 %v307
    %1100 = vmatprep.subr.mxu0 0.0
    %1101 = vmatpush1.msra.mxu0 %v312
    %1102 = vmatprep.subr.mxu0 0.0
    %1103 = vmatpush1.msra.mxu0 %v317
    %1104 = vmatprep.subr.mxu0 0.0
    %1105 = vmatpush1.msra.mxu0 %v322
    %1106 = vmatprep.subr.mxu0 0.0
    %1107 = vmatpush1.msra.mxu0 %v327
    %1108 = vmatprep.subr.mxu0 0.0
    %1109 = vmatpush1.msra.mxu0 %v332
    %1110 = vmatprep.subr.mxu0 0.0
    %1111 = vmatpush1.msra.mxu0 %v337
    %1112 = vmatprep.subr.mxu0 0.0
    %1113 = vmatpush1.msra.mxu0 %v342
    %1114 = vmatprep.subr.mxu0 0.0
    %1115 = vmatpush1.msra.mxu0 %v347
    %1116 = vmatprep.subr.mxu0 0.0
    %1117 = vmatpush1.msra.mxu0 %v352
    %1118 = vmatprep.mubr.f32.mxu0 %v549
    %1119 = vmatmul.mubr.f32.gmra.mrb[0].mxu0 %v548
    %v1120 = vpop.f32.mrb[0].mxu0
    %v1121 = vadd.f32 %v1051, %v1120
    %v1122 = vpop.f32.mrb[0].mxu0
    %1123 = vdwg.mxu0
    %1124 = vmatprep.subr.mxu0 0.0
    %1125 = vmatpush1.msra.mxu0 %v357
    %1126 = vmatprep.subr.mxu0 0.0
    %1127 = vmatpush1.msra.mxu0 %v362
    %1128 = vmatprep.subr.mxu0 0.0
    %1129 = vmatpush1.msra.mxu0 %v367
    %1130 = vmatprep.subr.mxu0 0.0
    %1131 = vmatpush1.msra.mxu0 %v372
    %1132 = vmatprep.subr.mxu0 0.0
    %1133 = vmatpush1.msra.mxu0 %v377
    %1134 = vmatprep.subr.mxu0 0.0
    %1135 = vmatpush1.msra.mxu0 %v382
    %1136 = vmatprep.subr.mxu0 0.0
    %1137 = vmatpush1.msra.mxu0 %v387
    %1138 = vmatprep.subr.mxu0 0.0
    %1139 = vmatpush1.msra.mxu0 %v392
    %1140 = vmatprep.subr.mxu0 0.0
    %1141 = vmatpush1.msra.mxu0 %v397
    %1142 = vmatprep.subr.mxu0 0.0
    %1143 = vmatpush1.msra.mxu0 %v402
    %1144 = vmatprep.subr.mxu0 0.0
    %1145 = vmatpush1.msra.mxu0 %v407
    %1146 = vmatprep.subr.mxu0 0.0
    %1147 = vmatpush1.msra.mxu0 %v412
    %1148 = vmatprep.subr.mxu0 0.0
    %1149 = vmatpush1.msra.mxu0 %v417
    %1150 = vmatprep.subr.mxu0 0.0
    %1151 = vmatpush1.msra.mxu0 %v422
    %1152 = vmatprep.subr.mxu0 0.0
    %1153 = vmatpush1.msra.mxu0 %v427
    %1154 = vmatprep.subr.mxu0 0.0
    %1155 = vmatpush1.msra.mxu0 %v432
    %1156 = vmatprep.subr.mxu0 0.0
    %1157 = vmatpush1.msra.mxu0 %v437
    %1158 = vmatprep.subr.mxu0 0.0
    %1159 = vmatpush1.msra.mxu0 %v442
    %1160 = vmatprep.subr.mxu0 0.0
    %1161 = vmatpush1.msra.mxu0 %v447
    %1162 = vmatprep.subr.mxu0 0.0
    %1163 = vmatpush1.msra.mxu0 %v452
    %1164 = vmatprep.subr.mxu0 0.0
    %1165 = vmatpush1.msra.mxu0 %v457
    %1166 = vmatprep.subr.mxu0 0.0
    %1167 = vmatpush1.msra.mxu0 %v462
    %1168 = vmatprep.subr.mxu0 0.0
    %1169 = vmatpush1.msra.mxu0 %v467
    %1170 = vmatprep.subr.mxu0 0.0
    %1171 = vmatpush1.msra.mxu0 %v472
    %1172 = vmatprep.subr.mxu0 0.0
    %1173 = vmatpush1.msra.mxu0 %v477
    %1174 = vmatprep.subr.mxu0 0.0
    %1175 = vmatpush1.msra.mxu0 %v482
    %1176 = vmatprep.subr.mxu0 0.0
    %1177 = vmatpush1.msra.mxu0 %v487
    %1178 = vmatprep.subr.mxu0 0.0
    %1179 = vmatpush1.msra.mxu0 %v492
    %1180 = vmatprep.subr.mxu0 0.0
    %1181 = vmatpush1.msra.mxu0 %v497
    %1182 = vmatprep.subr.mxu0 0.0
    %1183 = vmatpush1.msra.mxu0 %v502
    %1184 = vmatprep.subr.mxu0 0.0
    %1185 = vmatpush1.msra.mxu0 %v507
    %1186 = vmatprep.subr.mxu0 0.0
    %1187 = vmatpush1.msra.mxu0 %v512
    %1188 = vmatprep.mubr.f32.mxu0 %v551
    %1189 = vmatmul.mubr.f32.gmra.mrb[0].mxu0 %v550
    %v1190 = vpop.f32.mrb[0].mxu0
    %v1191 = vadd.f32 %v1121, %v1190
    %v1192 = vpop.f32.mrb[0].mxu0
    %1193 = vdwg.mxu0
    %v1194 = vmax.f32 %v767, 0.0
    %v1195 = vmax.f32 %v769, 0.0
    %v1196 = vmax.f32 %v980, 0.0
    %v1197 = vmax.f32 %v982, 0.0
    %v1198 = vmax.f32 %v1191, 0.0
    %v1199 = vld [vmem:[%s3] sm:$0xff]
    %v1200 = vld [vmem:[%s3 + $0x8] sm:$0xff]
    %v1201 = vld [vmem:[%s3 + $0x10] sm:$0xff]
    %v1202 = vld [vmem:[%s3 + $0x18] sm:$0xff]
    %v1203 = vld [vmem:[%s3 + $0x20] sm:$0xff]
    %v1204 = vld [vmem:[%s3 + $0x28] sm:$0xff]
    %v1205 = vld [vmem:[%s3 + $0x30] sm:$0xff]
    %v1206 = vld [vmem:[%s3 + $0x38] sm:$0xff]
    %v1207 = vld [vmem:[%s3 + $0x40] sm:$0xff]
    %v1208 = vld [vmem:[%s3 + $0x48] sm:$0xff]
    %v1209 = vld [vmem:[%s3 + $0x50] sm:$0xff]
    %v1210 = vld [vmem:[%s3 + $0x58] sm:$0xff]
    %v1211 = vld [vmem:[%s3 + $0x60] sm:$0xff]
    %v1212 = vld [vmem:[%s3 + $0x68] sm:$0xff]
    %v1213 = vld [vmem:[%s3 + $0x70] sm:$0xff]
    %v1214 = vld [vmem:[%s3 + $0x78] sm:$0xff]
    %v1215 = vld [vmem:[%s3 + $0x80] sm:$0xff]
    %v1216 = vld [vmem:[%s3 + $0x88] sm:$0xff]
    %v1217 = vld [vmem:[%s3 + $0x90] sm:$0xff]
    %v1218 = vld [vmem:[%s3 + $0x98] sm:$0xff]
    %v1219 = vld [vmem:[%s3 + $0xa0] sm:$0xff]
    %v1220 = vld [vmem:[%s3 + $0xa8] sm:$0xff]
    %v1221 = vld [vmem:[%s3 + $0xb0] sm:$0xff]
    %v1222 = vld [vmem:[%s3 + $0xb8] sm:$0xff]
    %v1223 = vld [vmem:[%s3 + $0xc0] sm:$0xff]
    %v1224 = vld [vmem:[%s3 + $0xc8] sm:$0xff]
    %v1225 = vld [vmem:[%s3 + $0xd0] sm:$0xff]
    %v1226 = vld [vmem:[%s3 + $0xd8] sm:$0xff]
    %v1227 = vld [vmem:[%s3 + $0xe0] sm:$0xff]
    %v1228 = vld [vmem:[%s3 + $0xe8] sm:$0xff]
    %v1229 = vld [vmem:[%s3 + $0xf0] sm:$0xff]
    %v1230 = vld [vmem:[%s3 + $0xf8] sm:$0xff]
    %v1231 = vld [vmem:[%s3 + $0x100] sm:$0xff]
    %v1232 = vld [vmem:[%s3 + $0x108] sm:$0xff]
    %v1233 = vld [vmem:[%s3 + $0x110] sm:$0xff]
    %v1234 = vld [vmem:[%s3 + $0x118] sm:$0xff]
    %v1235 = vld [vmem:[%s3 + $0x120] sm:$0xff]
    %v1236 = vld [vmem:[%s3 + $0x128] sm:$0xff]
    %v1237 = vld [vmem:[%s3 + $0x130] sm:$0xff]
    %v1238 = vld [vmem:[%s3 + $0x138] sm:$0xff]
    %v1239 = vld [vmem:[%s3 + $0x140] sm:$0xff]
    %v1240 = vld [vmem:[%s3 + $0x148] sm:$0xff]
    %v1241 = vld [vmem:[%s3 + $0x150] sm:$0xff]
    %v1242 = vld [vmem:[%s3 + $0x158] sm:$0xff]
    %v1243 = vld [vmem:[%s3 + $0x160] sm:$0xff]
    %v1244 = vld [vmem:[%s3 + $0x168] sm:$0xff]
    %v1245 = vld [vmem:[%s3 + $0x170] sm:$0xff]
    %v1246 = vld [vmem:[%s3 + $0x178] sm:$0xff]
    %v1247 = vld [vmem:[%s3 + $0x180] sm:$0xff]
    %v1248 = vld [vmem:[%s3 + $0x188] sm:$0xff]
    %v1249 = vld [vmem:[%s3 + $0x190] sm:$0xff]
    %v1250 = vld [vmem:[%s3 + $0x198] sm:$0xff]
    %v1251 = vld [vmem:[%s3 + $0x1a0] sm:$0xff]
    %v1252 = vld [vmem:[%s3 + $0x1a8] sm:$0xff]
    %v1253 = vld [vmem:[%s3 + $0x1b0] sm:$0xff]
    %v1254 = vld [vmem:[%s3 + $0x1b8] sm:$0xff]
    %v1255 = vld [vmem:[%s3 + $0x1c0] sm:$0xff]
    %v1256 = vld [vmem:[%s3 + $0x1c8] sm:$0xff]
    %v1257 = vld [vmem:[%s3 + $0x1d0] sm:$0xff]
    %v1258 = vld [vmem:[%s3 + $0x1d8] sm:$0xff]
    %v1259 = vld [vmem:[%s3 + $0x1e0] sm:$0xff]
    %v1260 = vld [vmem:[%s3 + $0x1e8] sm:$0xff]
    %v1261 = vld [vmem:[%s3 + $0x1f0] sm:$0xff]
    %v1262 = vld [vmem:[%s3 + $0x1f8] sm:$0xff]
    %v1263 = vld [vmem:[%s3 + $0x200] sm:$0xff]
    %v1264 = vld [vmem:[%s3 + $0x208] sm:$0xff]
    %v1265 = vld [vmem:[%s3 + $0x210] sm:$0xff]
    %v1266 = vld [vmem:[%s3 + $0x218] sm:$0xff]
    %v1267 = vld [vmem:[%s3 + $0x220] sm:$0xff]
    %v1268 = vld [vmem:[%s3 + $0x228] sm:$0xff]
    %v1269 = vld [vmem:[%s3 + $0x230] sm:$0xff]
    %v1270 = vld [vmem:[%s3 + $0x238] sm:$0xff]
    %v1271 = vld [vmem:[%s3 + $0x240] sm:$0xff]
    %v1272 = vld [vmem:[%s3 + $0x248] sm:$0xff]
    %v1273 = vld [vmem:[%s3 + $0x250] sm:$0xff]
    %v1274 = vld [vmem:[%s3 + $0x258] sm:$0xff]
    %v1275 = vld [vmem:[%s3 + $0x260] sm:$0xff]
    %v1276 = vld [vmem:[%s3 + $0x268] sm:$0xff]
    %v1277 = vld [vmem:[%s3 + $0x270] sm:$0xff]
    %v1278 = vld [vmem:[%s3 + $0x278] sm:$0xff]
    %v1279 = vld [vmem:[%s3 + $0x280] sm:$0xff]
    %v1280 = vld [vmem:[%s3 + $0x288] sm:$0xff]
    %v1281 = vld [vmem:[%s3 + $0x290] sm:$0xff]
    %v1282 = vld [vmem:[%s3 + $0x298] sm:$0xff]
    %v1283 = vld [vmem:[%s3 + $0x2a0] sm:$0xff]
    %v1284 = vld [vmem:[%s3 + $0x2a8] sm:$0xff]
    %v1285 = vld [vmem:[%s3 + $0x2b0] sm:$0xff]
    %v1286 = vld [vmem:[%s3 + $0x2b8] sm:$0xff]
    %v1287 = vld [vmem:[%s3 + $0x2c0] sm:$0xff]
    %v1288 = vld [vmem:[%s3 + $0x2c8] sm:$0xff]
    %v1289 = vld [vmem:[%s3 + $0x2d0] sm:$0xff]
    %v1290 = vld [vmem:[%s3 + $0x2d8] sm:$0xff]
    %v1291 = vld [vmem:[%s3 + $0x2e0] sm:$0xff]
    %v1292 = vld [vmem:[%s3 + $0x2e8] sm:$0xff]
    %v1293 = vld [vmem:[%s3 + $0x2f0] sm:$0xff]
    %v1294 = vld [vmem:[%s3 + $0x2f8] sm:$0xff]
    %v1295 = vld [vmem:[%s3 + $0x300] sm:$0xff]
    %v1296 = vld [vmem:[%s3 + $0x308] sm:$0xff]
    %v1297 = vld [vmem:[%s3 + $0x310] sm:$0xff]
    %v1298 = vld [vmem:[%s3 + $0x318] sm:$0xff]
    %v1299 = vld [vmem:[%s3 + $0x320] sm:$0xff]
    %v1300 = vld [vmem:[%s3 + $0x328] sm:$0xff]
    %v1301 = vld [vmem:[%s3 + $0x330] sm:$0xff]
    %v1302 = vld [vmem:[%s3 + $0x338] sm:$0xff]
    %v1303 = vld [vmem:[%s3 + $0x340] sm:$0xff]
    %v1304 = vld [vmem:[%s3 + $0x348] sm:$0xff]
    %v1305 = vld [vmem:[%s3 + $0x350] sm:$0xff]
    %v1306 = vld [vmem:[%s3 + $0x358] sm:$0xff]
    %v1307 = vld [vmem:[%s3 + $0x360] sm:$0xff]
    %v1308 = vld [vmem:[%s3 + $0x368] sm:$0xff]
    %v1309 = vld [vmem:[%s3 + $0x370] sm:$0xff]
    %v1310 = vld [vmem:[%s3 + $0x378] sm:$0xff]
    %v1311 = vld [vmem:[%s3 + $0x380] sm:$0xff]
    %v1312 = vld [vmem:[%s3 + $0x388] sm:$0xff]
    %v1313 = vld [vmem:[%s3 + $0x390] sm:$0xff]
    %v1314 = vld [vmem:[%s3 + $0x398] sm:$0xff]
    %v1315 = vld [vmem:[%s3 + $0x3a0] sm:$0xff]
    %v1316 = vld [vmem:[%s3 + $0x3a8] sm:$0xff]
    %v1317 = vld [vmem:[%s3 + $0x3b0] sm:$0xff]
    %v1318 = vld [vmem:[%s3 + $0x3b8] sm:$0xff]
    %v1319 = vld [vmem:[%s3 + $0x3c0] sm:$0xff]
    %v1320 = vld [vmem:[%s3 + $0x3c8] sm:$0xff]
    %v1321 = vld [vmem:[%s3 + $0x3d0] sm:$0xff]
    %v1322 = vld [vmem:[%s3 + $0x3d8] sm:$0xff]
    %v1323 = vld [vmem:[%s3 + $0x3e0] sm:$0xff]
    %v1324 = vld [vmem:[%s3 + $0x3e8] sm:$0xff]
    %v1325 = vld [vmem:[%s3 + $0x3f0] sm:$0xff]
    %v1326 = vld [vmem:[%s3 + $0x3f8] sm:$0xff]
    %v1327 = vld [vmem:[%s3 + $0x400] sm:$0xff]
    %v1328 = vld [vmem:[%s3 + $0x408] sm:$0xff]
    %v1329 = vld [vmem:[%s3 + $0x410] sm:$0xff]
    %v1330 = vld [vmem:[%s3 + $0x418] sm:$0xff]
    %v1331 = vld [vmem:[%s3 + $0x420] sm:$0xff]
    %v1332 = vld [vmem:[%s3 + $0x428] sm:$0xff]
    %v1333 = vld [vmem:[%s3 + $0x430] sm:$0xff]
    %v1334 = vld [vmem:[%s3 + $0x438] sm:$0xff]
    %v1335 = vld [vmem:[%s3 + $0x440] sm:$0xff]
    %v1336 = vld [vmem:[%s3 + $0x448] sm:$0xff]
    %v1337 = vld [vmem:[%s3 + $0x450] sm:$0xff]
    %v1338 = vld [vmem:[%s3 + $0x458] sm:$0xff]
    %v1339 = vld [vmem:[%s3 + $0x460] sm:$0xff]
    %v1340 = vld [vmem:[%s3 + $0x468] sm:$0xff]
    %v1341 = vld [vmem:[%s3 + $0x470] sm:$0xff]
    %v1342 = vld [vmem:[%s3 + $0x478] sm:$0xff]
    %v1343 = vld [vmem:[%s3 + $0x480] sm:$0xff]
    %v1344 = vld [vmem:[%s3 + $0x488] sm:$0xff]
    %v1345 = vld [vmem:[%s3 + $0x490] sm:$0xff]
    %v1346 = vld [vmem:[%s3 + $0x498] sm:$0xff]
    %v1347 = vld [vmem:[%s3 + $0x4a0] sm:$0xff]
    %v1348 = vld [vmem:[%s3 + $0x4a8] sm:$0xff]
    %v1349 = vld [vmem:[%s3 + $0x4b0] sm:$0xff]
    %v1350 = vld [vmem:[%s3 + $0x4b8] sm:$0xff]
    %v1351 = vld [vmem:[%s3 + $0x4c0] sm:$0xff]
    %v1352 = vld [vmem:[%s3 + $0x4c8] sm:$0xff]
    %v1353 = vld [vmem:[%s3 + $0x4d0] sm:$0xff]
    %v1354 = vld [vmem:[%s3 + $0x4d8] sm:$0xff]
    %v1355 = vld [vmem:[%s3 + $0x4e0] sm:$0xff]
    %v1356 = vld [vmem:[%s3 + $0x4e8] sm:$0xff]
    %v1357 = vld [vmem:[%s3 + $0x4f0] sm:$0xff]
    %v1358 = vld [vmem:[%s3 + $0x4f8] sm:$0xff]
    %v1359 = vld [vmem:[%s3 + $0x500] sm:$0xff]
    %v1360 = vld [vmem:[%s3 + $0x508] sm:$0xff]
    %v1361 = vld [vmem:[%s3 + $0x510] sm:$0xff]
    %v1362 = vld [vmem:[%s3 + $0x518] sm:$0xff]
    %v1363 = vld [vmem:[%s3 + $0x520] sm:$0xff]
    %v1364 = vld [vmem:[%s3 + $0x528] sm:$0xff]
    %v1365 = vld [vmem:[%s3 + $0x530] sm:$0xff]
    %v1366 = vld [vmem:[%s3 + $0x538] sm:$0xff]
    %v1367 = vld [vmem:[%s3 + $0x540] sm:$0xff]
    %v1368 = vld [vmem:[%s3 + $0x548] sm:$0xff]
    %v1369 = vld [vmem:[%s3 + $0x550] sm:$0xff]
    %v1370 = vld [vmem:[%s3 + $0x558] sm:$0xff]
    %v1371 = vld [vmem:[%s3 + $0x560] sm:$0xff]
    %v1372 = vld [vmem:[%s3 + $0x568] sm:$0xff]
    %v1373 = vld [vmem:[%s3 + $0x570] sm:$0xff]
    %v1374 = vld [vmem:[%s3 + $0x578] sm:$0xff]
    %v1375 = vld [vmem:[%s3 + $0x580] sm:$0xff]
    %v1376 = vld [vmem:[%s3 + $0x588] sm:$0xff]
    %v1377 = vld [vmem:[%s3 + $0x590] sm:$0xff]
    %v1378 = vld [vmem:[%s3 + $0x598] sm:$0xff]
    %v1379 = vld [vmem:[%s3 + $0x5a0] sm:$0xff]
    %v1380 = vld [vmem:[%s3 + $0x5a8] sm:$0xff]
    %v1381 = vld [vmem:[%s3 + $0x5b0] sm:$0xff]
    %v1382 = vld [vmem:[%s3 + $0x5b8] sm:$0xff]
    %v1383 = vld [vmem:[%s3 + $0x5c0] sm:$0xff]
    %v1384 = vld [vmem:[%s3 + $0x5c8] sm:$0xff]
    %v1385 = vld [vmem:[%s3 + $0x5d0] sm:$0xff]
    %v1386 = vld [vmem:[%s3 + $0x5d8] sm:$0xff]
    %v1387 = vld [vmem:[%s3 + $0x5e0] sm:$0xff]
    %v1388 = vld [vmem:[%s3 + $0x5e8] sm:$0xff]
    %v1389 = vld [vmem:[%s3 + $0x5f0] sm:$0xff]
    %v1390 = vld [vmem:[%s3 + $0x5f8] sm:$0xff]
    %v1391 = vld [vmem:[%s3 + $0x600] sm:$0xff]
    %v1392 = vld [vmem:[%s3 + $0x608] sm:$0xff]
    %v1393 = vld [vmem:[%s3 + $0x610] sm:$0xff]
    %v1394 = vld [vmem:[%s3 + $0x618] sm:$0xff]
    %v1395 = vld [vmem:[%s3 + $0x620] sm:$0xff]
    %v1396 = vld [vmem:[%s3 + $0x628] sm:$0xff]
    %v1397 = vld [vmem:[%s3 + $0x630] sm:$0xff]
    %v1398 = vld [vmem:[%s3 + $0x638] sm:$0xff]
    %v1399 = vld [vmem:[%s3 + $0x640] sm:$0xff]
    %v1400 = vld [vmem:[%s3 + $0x648] sm:$0xff]
    %v1401 = vld [vmem:[%s3 + $0x650] sm:$0xff]
    %v1402 = vld [vmem:[%s3 + $0x658] sm:$0xff]
    %v1403 = vld [vmem:[%s3 + $0x660] sm:$0xff]
    %v1404 = vld [vmem:[%s3 + $0x668] sm:$0xff]
    %v1405 = vld [vmem:[%s3 + $0x670] sm:$0xff]
    %v1406 = vld [vmem:[%s3 + $0x678] sm:$0xff]
    %v1407 = vld [vmem:[%s3 + $0x680] sm:$0xff]
    %v1408 = vld [vmem:[%s3 + $0x688] sm:$0xff]
    %v1409 = vld [vmem:[%s3 + $0x690] sm:$0xff]
    %v1410 = vld [vmem:[%s3 + $0x698] sm:$0xff]
    %v1411 = vld [vmem:[%s3 + $0x6a0] sm:$0xff]
    %v1412 = vld [vmem:[%s3 + $0x6a8] sm:$0xff]
    %v1413 = vld [vmem:[%s3 + $0x6b0] sm:$0xff]
    %v1414 = vld [vmem:[%s3 + $0x6b8] sm:$0xff]
    %v1415 = vld [vmem:[%s3 + $0x6c0] sm:$0xff]
    %v1416 = vld [vmem:[%s3 + $0x6c8] sm:$0xff]
    %v1417 = vld [vmem:[%s3 + $0x6d0] sm:$0xff]
    %v1418 = vld [vmem:[%s3 + $0x6d8] sm:$0xff]
    %v1419 = vld [vmem:[%s3 + $0x6e0] sm:$0xff]
    %v1420 = vld [vmem:[%s3 + $0x6e8] sm:$0xff]
    %v1421 = vld [vmem:[%s3 + $0x6f0] sm:$0xff]
    %v1422 = vld [vmem:[%s3 + $0x6f8] sm:$0xff]
    %v1423 = vld [vmem:[%s3 + $0x700] sm:$0xff]
    %v1424 = vld [vmem:[%s4] sm:$0x7]
    %v1426 = vlaneseq
    %v1427 = vshrl.u32 %v1426, 7
    %v1428 = vsub.s32 0, %v1427
    %v1429 = vrot.slane %v1424, %v1428
    %v1430 = vlaneseq
    %v1431 = vshrl.u32 %v1430, 7
    %v1432 = vsub.s32 1, %v1431
    %v1433 = vrot.slane %v1424, %v1432
    %v1434 = vlaneseq
    %v1435 = vshrl.u32 %v1434, 7
    %v1436 = vsub.s32 2, %v1435
    %v1437 = vrot.slane %v1424, %v1436
    %vm1441 = vcmask 719872
    %v1443 = vsel %vm1441, %v1198, 0
    %1445 = vmatprep.subr.mxu0 %v1200
    %1446 = vmatpush1.msra.mxu0 %v1199
    %1447 = vmatprep.subr.mxu0 %v1203
    %1448 = vmatpush1.msra.mxu0 %v1202
    %1449 = vmatprep.subr.mxu0 %v1206
    %1450 = vmatpush1.msra.mxu0 %v1205
    %1451 = vmatprep.subr.mxu0 %v1209
    %1452 = vmatpush1.msra.mxu0 %v1208
    %1453 = vmatprep.subr.mxu0 %v1212
    %1454 = vmatpush1.msra.mxu0 %v1211
    %1455 = vmatprep.subr.mxu0 %v1215
    %1456 = vmatpush1.msra.mxu0 %v1214
    %1457 = vmatprep.subr.mxu0 %v1218
    %1458 = vmatpush1.msra.mxu0 %v1217
    %1459 = vmatprep.subr.mxu0 %v1221
    %1460 = vmatpush1.msra.mxu0 %v1220
    %1461 = vmatprep.subr.mxu0 %v1224
    %1462 = vmatpush1.msra.mxu0 %v1223
    %1463 = vmatprep.subr.mxu0 %v1227
    %1464 = vmatpush1.msra.mxu0 %v1226
    %1465 = vmatprep.subr.mxu0 %v1230
    %1466 = vmatpush1.msra.mxu0 %v1229
    %1467 = vmatprep.subr.mxu0 %v1233
    %1468 = vmatpush1.msra.mxu0 %v1232
    %1469 = vmatprep.subr.mxu0 %v1236
    %1470 = vmatpush1.msra.mxu0 %v1235
    %1471 = vmatprep.subr.mxu0 %v1239
    %1472 = vmatpush1.msra.mxu0 %v1238
    %1473 = vmatprep.subr.mxu0 %v1242
    %1474 = vmatpush1.msra.mxu0 %v1241
    %1475 = vmatprep.subr.mxu0 %v1245
    %1476 = vmatpush1.msra.mxu0 %v1244
    %1477 = vmatprep.subr.mxu0 %v1248
    %1478 = vmatpush1.msra.mxu0 %v1247
    %1479 = vmatprep.subr.mxu0 %v1251
    %1480 = vmatpush1.msra.mxu0 %v1250
    %1481 = vmatprep.subr.mxu0 %v1254
    %1482 = vmatpush1.msra.mxu0 %v1253
    %1483 = vmatprep.subr.mxu0 %v1257
    %1484 = vmatpush1.msra.mxu0 %v1256
    %1485 = vmatprep.subr.mxu0 %v1260
    %1486 = vmatpush1.msra.mxu0 %v1259
    %1487 = vmatprep.subr.mxu0 %v1263
    %1488 = vmatpush1.msra.mxu0 %v1262
    %1489 = vmatprep.subr.mxu0 %v1266
    %1490 = vmatpush1.msra.mxu0 %v1265
    %1491 = vmatprep.subr.mxu0 %v1269
    %1492 = vmatpush1.msra.mxu0 %v1268
    %1493 = vmatprep.subr.mxu0 %v1272
    %1494 = vmatpush1.msra.mxu0 %v1271
    %1495 = vmatprep.subr.mxu0 %v1275
    %1496 = vmatpush1.msra.mxu0 %v1274
    %1497 = vmatprep.subr.mxu0 %v1278
    %1498 = vmatpush1.msra.mxu0 %v1277
    %1499 = vmatprep.subr.mxu0 %v1281
    %1500 = vmatpush1.msra.mxu0 %v1280
    %1501 = vmatprep.subr.mxu0 %v1284
    %1502 = vmatpush1.msra.mxu0 %v1283
    %1503 = vmatprep.subr.mxu0 %v1287
    %1504 = vmatpush1.msra.mxu0 %v1286
    %1505 = vmatprep.subr.mxu0 %v1290
    %1506 = vmatpush1.msra.mxu0 %v1289
    %1507 = vmatprep.subr.mxu0 %v1293
    %1508 = vmatpush1.msra.mxu0 %v1292
    %1509 = vmatprep.mubr.f32.mxu0 %v1195
    %1510 = vmatmul.mubr.f32.gmra.mrb[0].mxu0 %v1194
    %v1511 = vpop.f32.mrb[0].mxu0
    %v1512 = vadd.f32 %v1429, %v1511
    %v1513 = vpop.f32.mrb[0].mxu0
    %v1514 = vadd.f32 %v1433, %v1513
    %1515 = vdwg.mxu0
    %1516 = vmatprep.subr.mxu0 %v1296
    %1517 = vmatpush1.msra.mxu0 %v1295
    %1518 = vmatprep.subr.mxu0 %v1299
    %1519 = vmatpush1.msra.mxu0 %v1298
    %1520 = vmatprep.subr.mxu0 %v1302
    %1521 = vmatpush1.msra.mxu0 %v1301
    %1522 = vmatprep.subr.mxu0 %v1305
    %1523 = vmatpush1.msra.mxu0 %v1304
    %1524 = vmatprep.subr.mxu0 %v1308
    %1525 = vmatpush1.msra.mxu0 %v1307
    %1526 = vmatprep.subr.mxu0 %v1311
    %1527 = vmatpush1.msra.mxu0 %v1310
    %1528 = vmatprep.subr.mxu0 %v1314
    %1529 = vmatpush1.msra.mxu0 %v1313
    %1530 = vmatprep.subr.mxu0 %v1317
    %1531 = vmatpush1.msra.mxu0 %v1316
    %1532 = vmatprep.subr.mxu0 %v1320
    %1533 = vmatpush1.msra.mxu0 %v1319
    %1534 = vmatprep.subr.mxu0 %v1323
    %1535 = vmatpush1.msra.mxu0 %v1322
    %1536 = vmatprep.subr.mxu0 %v1326
    %1537 = vmatpush1.msra.mxu0 %v1325
    %1538 = vmatprep.subr.mxu0 %v1329
    %1539 = vmatpush1.msra.mxu0 %v1328
    %1540 = vmatprep.subr.mxu0 %v1332
    %1541 = vmatpush1.msra.mxu0 %v1331
    %1542 = vmatprep.subr.mxu0 %v1335
    %1543 = vmatpush1.msra.mxu0 %v1334
    %1544 = vmatprep.subr.mxu0 %v1338
    %1545 = vmatpush1.msra.mxu0 %v1337
    %1546 = vmatprep.subr.mxu0 %v1341
    %1547 = vmatpush1.msra.mxu0 %v1340
    %1548 = vmatprep.subr.mxu0 %v1344
    %1549 = vmatpush1.msra.mxu0 %v1343
    %1550 = vmatprep.subr.mxu0 %v1347
    %1551 = vmatpush1.msra.mxu0 %v1346
    %1552 = vmatprep.subr.mxu0 %v1350
    %1553 = vmatpush1.msra.mxu0 %v1349
    %1554 = vmatprep.subr.mxu0 %v1353
    %1555 = vmatpush1.msra.mxu0 %v1352
    %1556 = vmatprep.subr.mxu0 %v1356
    %1557 = vmatpush1.msra.mxu0 %v1355
    %1558 = vmatprep.subr.mxu0 %v1359
    %1559 = vmatpush1.msra.mxu0 %v1358
    %1560 = vmatprep.subr.mxu0 %v1362
    %1561 = vmatpush1.msra.mxu0 %v1361
    %1562 = vmatprep.subr.mxu0 %v1365
    %1563 = vmatpush1.msra.mxu0 %v1364
    %1564 = vmatprep.subr.mxu0 %v1368
    %1565 = vmatpush1.msra.mxu0 %v1367
    %1566 = vmatprep.subr.mxu0 %v1371
    %1567 = vmatpush1.msra.mxu0 %v1370
    %1568 = vmatprep.subr.mxu0 %v1374
    %1569 = vmatpush1.msra.mxu0 %v1373
    %1570 = vmatprep.subr.mxu0 %v1377
    %1571 = vmatpush1.msra.mxu0 %v1376
    %1572 = vmatprep.subr.mxu0 %v1380
    %1573 = vmatpush1.msra.mxu0 %v1379
    %1574 = vmatprep.subr.mxu0 %v1383
    %1575 = vmatpush1.msra.mxu0 %v1382
    %1576 = vmatprep.subr.mxu0 %v1386
    %1577 = vmatpush1.msra.mxu0 %v1385
    %1578 = vmatprep.subr.mxu0 %v1389
    %1579 = vmatpush1.msra.mxu0 %v1388
    %1580 = vmatprep.mubr.f32.mxu0 %v1197
    %1581 = vmatmul.mubr.f32.gmra.mrb[0].mxu0 %v1196
    %v1582 = vpop.f32.mrb[0].mxu0
    %v1583 = vadd.f32 %v1512, %v1582
    %v1584 = vpop.f32.mrb[0].mxu0
    %v1585 = vadd.f32 %v1514, %v1584
    %1586 = vdwg.mxu0
    %1587 = vmatprep.subr.mxu0 %v1392
    %1588 = vmatpush1.msra.mxu0 %v1391
    %1589 = vmatprep.subr.mxu0 %v1395
    %1590 = vmatpush1.msra.mxu0 %v1394
    %1591 = vmatprep.subr.mxu0 %v1398
    %1592 = vmatpush1.msra.mxu0 %v1397
    %1593 = vmatprep.subr.mxu0 %v1401
    %1594 = vmatpush1.msra.mxu0 %v1400
    %1595 = vmatprep.subr.mxu0 %v1404
    %1596 = vmatpush1.msra.mxu0 %v1403
    %1597 = vmatprep.subr.mxu0 %v1407
    %1598 = vmatpush1.msra.mxu0 %v1406
    %1599 = vmatprep.subr.mxu0 %v1410
    %1600 = vmatpush1.msra.mxu0 %v1409
    %1601 = vmatprep.subr.mxu0 %v1413
    %1602 = vmatpush1.msra.mxu0 %v1412
    %1603 = vmatprep.subr.mxu0 %v1416
    %1604 = vmatpush1.msra.mxu0 %v1415
    %1605 = vmatprep.subr.mxu0 %v1419
    %1606 = vmatpush1.msra.mxu0 %v1418
    %1607 = vmatprep.subr.mxu0 %v1422
    %1608 = vmatpush1.msra.mxu0 %v1421
    %1609 = vmatprep.subr.mxu0 0.0
    %1610 = vmatpush1.msra.mxu0 0.0
    %1611 = vmatprep.subr.mxu0 0.0
    %1612 = vmatpush1.msra.mxu0 0.0
    %1613 = vmatprep.subr.mxu0 0.0
    %1614 = vmatpush1.msra.mxu0 0.0
    %1615 = vmatprep.subr.mxu0 0.0
    %1616 = vmatpush1.msra.mxu0 0.0
    %1617 = vmatprep.subr.mxu0 0.0
    %1618 = vmatpush1.msra.mxu0 0.0
    %1619 = vmatprep.subr.mxu0 0.0
    %1620 = vmatpush1.msra.mxu0 0.0
    %1621 = vmatprep.subr.mxu0 0.0
    %1622 = vmatpush1.msra.mxu0 0.0
    %1623 = vmatprep.subr.mxu0 0.0
    %1624 = vmatpush1.msra.mxu0 0.0
    %1625 = vmatprep.subr.mxu0 0.0
    %1626 = vmatpush1.msra.mxu0 0.0
    %1627 = vmatprep.subr.mxu0 0.0
    %1628 = vmatpush1.msra.mxu0 0.0
    %1629 = vmatprep.subr.mxu0 0.0
    %1630 = vmatpush1.msra.mxu0 0.0
    %1631 = vmatprep.subr.mxu0 0.0
    %1632 = vmatpush1.msra.mxu0 0.0
    %1633 = vmatprep.subr.mxu0 0.0
    %1634 = vmatpush1.msra.mxu0 0.0
    %1635 = vmatprep.subr.mxu0 0.0
    %1636 = vmatpush1.msra.mxu0 0.0
    %1637 = vmatprep.subr.mxu0 0.0
    %1638 = vmatpush1.msra.mxu0 0.0
    %1639 = vmatprep.subr.mxu0 0.0
    %1640 = vmatpush1.msra.mxu0 0.0
    %1641 = vmatprep.subr.mxu0 0.0
    %1642 = vmatpush1.msra.mxu0 0.0
    %1643 = vmatprep.subr.mxu0 0.0
    %1644 = vmatpush1.msra.mxu0 0.0
    %1645 = vmatprep.subr.mxu0 0.0
    %1646 = vmatpush1.msra.mxu0 0.0
    %1647 = vmatprep.subr.mxu0 0.0
    %1648 = vmatpush1.msra.mxu0 0.0
    %1649 = vmatprep.subr.mxu0 0.0
    %1650 = vmatpush1.msra.mxu0 0.0
    %1651 = vmatprep.mubr.f32.mxu0 0.0
    %1652 = vmatmul.mubr.f32.gmra.mrb[0].mxu0 %v1443
    %v1653 = vpop.f32.mrb[0].mxu0
    %v1654 = vadd.f32 %v1583, %v1653
    %v1655 = vpop.f32.mrb[0].mxu0
    %v1656 = vadd.f32 %v1585, %v1655
    %1657 = vdwg.mxu0
    %1658 = vmatprep.subr.mxu0 0.0
    %1659 = vmatpush1.msra.mxu0 %v1201
    %1660 = vmatprep.subr.mxu0 0.0
    %1661 = vmatpush1.msra.mxu0 %v1204
    %1662 = vmatprep.subr.mxu0 0.0
    %1663 = vmatpush1.msra.mxu0 %v1207
    %1664 = vmatprep.subr.mxu0 0.0
    %1665 = vmatpush1.msra.mxu0 %v1210
    %1666 = vmatprep.subr.mxu0 0.0
    %1667 = vmatpush1.msra.mxu0 %v1213
    %1668 = vmatprep.subr.mxu0 0.0
    %1669 = vmatpush1.msra.mxu0 %v1216
    %1670 = vmatprep.subr.mxu0 0.0
    %1671 = vmatpush1.msra.mxu0 %v1219
    %1672 = vmatprep.subr.mxu0 0.0
    %1673 = vmatpush1.msra.mxu0 %v1222
    %1674 = vmatprep.subr.mxu0 0.0
    %1675 = vmatpush1.msra.mxu0 %v1225
    %1676 = vmatprep.subr.mxu0 0.0
    %1677 = vmatpush1.msra.mxu0 %v1228
    %1678 = vmatprep.subr.mxu0 0.0
    %1679 = vmatpush1.msra.mxu0 %v1231
    %1680 = vmatprep.subr.mxu0 0.0
    %1681 = vmatpush1.msra.mxu0 %v1234
    %1682 = vmatprep.subr.mxu0 0.0
    %1683 = vmatpush1.msra.mxu0 %v1237
    %1684 = vmatprep.subr.mxu0 0.0
    %1685 = vmatpush1.msra.mxu0 %v1240
    %1686 = vmatprep.subr.mxu0 0.0
    %1687 = vmatpush1.msra.mxu0 %v1243
    %1688 = vmatprep.subr.mxu0 0.0
    %1689 = vmatpush1.msra.mxu0 %v1246
    %1690 = vmatprep.subr.mxu0 0.0
    %1691 = vmatpush1.msra.mxu0 %v1249
    %1692 = vmatprep.subr.mxu0 0.0
    %1693 = vmatpush1.msra.mxu0 %v1252
    %1694 = vmatprep.subr.mxu0 0.0
    %1695 = vmatpush1.msra.mxu0 %v1255
    %1696 = vmatprep.subr.mxu0 0.0
    %1697 = vmatpush1.msra.mxu0 %v1258
    %1698 = vmatprep.subr.mxu0 0.0
    %1699 = vmatpush1.msra.mxu0 %v1261
    %1700 = vmatprep.subr.mxu0 0.0
    %1701 = vmatpush1.msra.mxu0 %v1264
    %1702 = vmatprep.subr.mxu0 0.0
    %1703 = vmatpush1.msra.mxu0 %v1267
    %1704 = vmatprep.subr.mxu0 0.0
    %1705 = vmatpush1.msra.mxu0 %v1270
    %1706 = vmatprep.subr.mxu0 0.0
    %1707 = vmatpush1.msra.mxu0 %v1273
    %1708 = vmatprep.subr.mxu0 0.0
    %1709 = vmatpush1.msra.mxu0 %v1276
    %1710 = vmatprep.subr.mxu0 0.0
    %1711 = vmatpush1.msra.mxu0 %v1279
    %1712 = vmatprep.subr.mxu0 0.0
    %1713 = vmatpush1.msra.mxu0 %v1282
    %1714 = vmatprep.subr.mxu0 0.0
    %1715 = vmatpush1.msra.mxu0 %v1285
    %1716 = vmatprep.subr.mxu0 0.0
    %1717 = vmatpush1.msra.mxu0 %v1288
    %1718 = vmatprep.subr.mxu0 0.0
    %1719 = vmatpush1.msra.mxu0 %v1291
    %1720 = vmatprep.subr.mxu0 0.0
    %1721 = vmatpush1.msra.mxu0 %v1294
    %1722 = vmatprep.mubr.f32.mxu0 %v1195
    %1723 = vmatmul.mubr.f32.gmra.mrb[0].mxu0 %v1194
    %v1724 = vpop.f32.mrb[0].mxu0
    %v1725 = vadd.f32 %v1437, %v1724
    %v1726 = vpop.f32.mrb[0].mxu0
    %1727 = vdwg.mxu0
    %1728 = vmatprep.subr.mxu0 0.0
    %1729 = vmatpush1.msra.mxu0 %v1297
    %1730 = vmatprep.subr.mxu0 0.0
    %1731 = vmatpush1.msra.mxu0 %v1300
    %1732 = vmatprep.subr.mxu0 0.0
    %1733 = vmatpush1.msra.mxu0 %v1303
    %1734 = vmatprep.subr.mxu0 0.0
    %1735 = vmatpush1.msra.mxu0 %v1306
    %1736 = vmatprep.subr.mxu0 0.0
    %1737 = vmatpush1.msra.mxu0 %v1309
    %1738 = vmatprep.subr.mxu0 0.0
    %1739 = vmatpush1.msra.mxu0 %v1312
    %1740 = vmatprep.subr.mxu0 0.0
    %1741 = vmatpush1.msra.mxu0 %v1315
    %1742 = vmatprep.subr.mxu0 0.0
    %1743 = vmatpush1.msra.mxu0 %v1318
    %1744 = vmatprep.subr.mxu0 0.0
    %1745 = vmatpush1.msra.mxu0 %v1321
    %1746 = vmatprep.subr.mxu0 0.0
    %1747 = vmatpush1.msra.mxu0 %v1324
    %1748 = vmatprep.subr.mxu0 0.0
    %1749 = vmatpush1.msra.mxu0 %v1327
    %1750 = vmatprep.subr.mxu0 0.0
    %1751 = vmatpush1.msra.mxu0 %v1330
    %1752 = vmatprep.subr.mxu0 0.0
    %1753 = vmatpush1.msra.mxu0 %v1333
    %1754 = vmatprep.subr.mxu0 0.0
    %1755 = vmatpush1.msra.mxu0 %v1336
    %1756 = vmatprep.subr.mxu0 0.0
    %1757 = vmatpush1.msra.mxu0 %v1339
    %1758 = vmatprep.subr.mxu0 0.0
    %1759 = vmatpush1.msra.mxu0 %v1342
    %1760 = vmatprep.subr.mxu0 0.0
    %1761 = vmatpush1.msra.mxu0 %v1345
    %1762 = vmatprep.subr.mxu0 0.0
    %1763 = vmatpush1.msra.mxu0 %v1348
    %1764 = vmatprep.subr.mxu0 0.0
    %1765 = vmatpush1.msra.mxu0 %v1351
    %1766 = vmatprep.subr.mxu0 0.0
    %1767 = vmatpush1.msra.mxu0 %v1354
    %1768 = vmatprep.subr.mxu0 0.0
    %1769 = vmatpush1.msra.mxu0 %v1357
    %1770 = vmatprep.subr.mxu0 0.0
    %1771 = vmatpush1.msra.mxu0 %v1360
    %1772 = vmatprep.subr.mxu0 0.0
    %1773 = vmatpush1.msra.mxu0 %v1363
    %1774 = vmatprep.subr.mxu0 0.0
    %1775 = vmatpush1.msra.mxu0 %v1366
    %1776 = vmatprep.subr.mxu0 0.0
    %1777 = vmatpush1.msra.mxu0 %v1369
    %1778 = vmatprep.subr.mxu0 0.0
    %1779 = vmatpush1.msra.mxu0 %v1372
    %1780 = vmatprep.subr.mxu0 0.0
    %1781 = vmatpush1.msra.mxu0 %v1375
    %1782 = vmatprep.subr.mxu0 0.0
    %1783 = vmatpush1.msra.mxu0 %v1378
    %1784 = vmatprep.subr.mxu0 0.0
    %1785 = vmatpush1.msra.mxu0 %v1381
    %1786 = vmatprep.subr.mxu0 0.0
    %1787 = vmatpush1.msra.mxu0 %v1384
    %1788 = vmatprep.subr.mxu0 0.0
    %1789 = vmatpush1.msra.mxu0 %v1387
    %1790 = vmatprep.subr.mxu0 0.0
    %1791 = vmatpush1.msra.mxu0 %v1390
    %1792 = vmatprep.mubr.f32.mxu0 %v1197
    %1793 = vmatmul.mubr.f32.gmra.mrb[0].mxu0 %v1196
    %v1794 = vpop.f32.mrb[0].mxu0
    %v1795 = vadd.f32 %v1725, %v1794
    %v1796 = vpop.f32.mrb[0].mxu0
    %1797 = vdwg.mxu0
    %1798 = vmatprep.subr.mxu0 0.0
    %1799 = vmatpush1.msra.mxu0 %v1393
    %1800 = vmatprep.subr.mxu0 0.0
    %1801 = vmatpush1.msra.mxu0 %v1396
    %1802 = vmatprep.subr.mxu0 0.0
    %1803 = vmatpush1.msra.mxu0 %v1399
    %1804 = vmatprep.subr.mxu0 0.0
    %1805 = vmatpush1.msra.mxu0 %v1402
    %1806 = vmatprep.subr.mxu0 0.0
    %1807 = vmatpush1.msra.mxu0 %v1405
    %1808 = vmatprep.subr.mxu0 0.0
    %1809 = vmatpush1.msra.mxu0 %v1408
    %1810 = vmatprep.subr.mxu0 0.0
    %1811 = vmatpush1.msra.mxu0 %v1411
    %1812 = vmatprep.subr.mxu0 0.0
    %1813 = vmatpush1.msra.mxu0 %v1414
    %1814 = vmatprep.subr.mxu0 0.0
    %1815 = vmatpush1.msra.mxu0 %v1417
    %1816 = vmatprep.subr.mxu0 0.0
    %1817 = vmatpush1.msra.mxu0 %v1420
    %1818 = vmatprep.subr.mxu0 0.0
    %1819 = vmatpush1.msra.mxu0 %v1423
    %1820 = vmatprep.subr.mxu0 0.0
    %1821 = vmatpush1.msra.mxu0 0.0
    %1822 = vmatprep.subr.mxu0 0.0
    %1823 = vmatpush1.msra.mxu0 0.0
    %1824 = vmatprep.subr.mxu0 0.0
    %1825 = vmatpush1.msra.mxu0 0.0
    %1826 = vmatprep.subr.mxu0 0.0
    %1827 = vmatpush1.msra.mxu0 0.0
    %1828 = vmatprep.subr.mxu0 0.0
    %1829 = vmatpush1.msra.mxu0 0.0
    %1830 = vmatprep.subr.mxu0 0.0
    %1831 = vmatpush1.msra.mxu0 0.0
    %1832 = vmatprep.subr.mxu0 0.0
    %1833 = vmatpush1.msra.mxu0 0.0
    %1834 = vmatprep.subr.mxu0 0.0
    %1835 = vmatpush1.msra.mxu0 0.0
    %1836 = vmatprep.subr.mxu0 0.0
    %1837 = vmatpush1.msra.mxu0 0.0
    %1838 = vmatprep.subr.mxu0 0.0
    %1839 = vmatpush1.msra.mxu0 0.0
    %1840 = vmatprep.subr.mxu0 0.0
    %1841 = vmatpush1.msra.mxu0 0.0
    %1842 = vmatprep.subr.mxu0 0.0
    %1843 = vmatpush1.msra.mxu0 0.0
    %1844 = vmatprep.subr.mxu0 0.0
    %1845 = vmatpush1.msra.mxu0 0.0
    %1846 = vmatprep.subr.mxu0 0.0
    %1847 = vmatpush1.msra.mxu0 0.0
    %1848 = vmatprep.subr.mxu0 0.0
    %1849 = vmatpush1.msra.mxu0 0.0
    %1850 = vmatprep.subr.mxu0 0.0
    %1851 = vmatpush1.msra.mxu0 0.0
    %1852 = vmatprep.subr.mxu0 0.0
    %1853 = vmatpush1.msra.mxu0 0.0
    %1854 = vmatprep.subr.mxu0 0.0
    %1855 = vmatpush1.msra.mxu0 0.0
    %1856 = vmatprep.subr.mxu0 0.0
    %1857 = vmatpush1.msra.mxu0 0.0
    %1858 = vmatprep.subr.mxu0 0.0
    %1859 = vmatpush1.msra.mxu0 0.0
    %1860 = vmatprep.subr.mxu0 0.0
    %1861 = vmatpush1.msra.mxu0 0.0
    %1862 = vmatprep.mubr.f32.mxu0 0.0
    %1863 = vmatmul.mubr.f32.gmra.mrb[0].mxu0 %v1443
    %v1864 = vpop.f32.mrb[0].mxu0
    %v1865 = vadd.f32 %v1795, %v1864
    %v1866 = vpop.f32.mrb[0].mxu0
    %1867 = vdwg.mxu0
    %v1868 = vmax.f32 %v1654, 0.0
    %v1869 = vmax.f32 %v1656, 0.0
    %v1870 = vmax.f32 %v1865, 0.0
    %v1871 = vld [vmem:[%s5] sm:$0xff]
    %v1872 = vld [vmem:[%s5 + $0x8] sm:$0xff]
    %v1873 = vld [vmem:[%s5 + $0x10] sm:$0xff]
    %v1874 = vld [vmem:[%s5 + $0x18] sm:$0xff]
    %v1875 = vld [vmem:[%s5 + $0x20] sm:$0xff]
    %v1876 = vld [vmem:[%s5 + $0x28] sm:$0xff]
    %v1877 = vld [vmem:[%s5 + $0x30] sm:$0xff]
    %v1878 = vld [vmem:[%s5 + $0x38] sm:$0xff]
    %v1879 = vld [vmem:[%s5 + $0x40] sm:$0xff]
    %v1880 = vld [vmem:[%s5 + $0x48] sm:$0xff]
    %v1881 = vld [vmem:[%s5 + $0x50] sm:$0xff]
    %v1882 = vld [vmem:[%s5 + $0x58] sm:$0xff]
    %v1883 = vld [vmem:[%s5 + $0x60] sm:$0xff]
    %v1884 = vld [vmem:[%s5 + $0x68] sm:$0xff]
    %v1885 = vld [vmem:[%s5 + $0x70] sm:$0xff]
    %v1886 = vld [vmem:[%s5 + $0x78] sm:$0xff]
    %v1887 = vld [vmem:[%s5 + $0x80] sm:$0xff]
    %v1888 = vld [vmem:[%s5 + $0x88] sm:$0xff]
    %v1889 = vld [vmem:[%s5 + $0x90] sm:$0xff]
    %v1890 = vld [vmem:[%s5 + $0x98] sm:$0xff]
    %v1891 = vld [vmem:[%s5 + $0xa0] sm:$0xff]
    %v1892 = vld [vmem:[%s5 + $0xa8] sm:$0xff]
    %v1893 = vld [vmem:[%s5 + $0xb0] sm:$0xff]
    %v1894 = vld [vmem:[%s5 + $0xb8] sm:$0xff]
    %v1895 = vld [vmem:[%s5 + $0xc0] sm:$0xff]
    %v1896 = vld [vmem:[%s5 + $0xc8] sm:$0xff]
    %v1897 = vld [vmem:[%s5 + $0xd0] sm:$0xff]
    %v1898 = vld [vmem:[%s5 + $0xd8] sm:$0xff]
    %v1899 = vld [vmem:[%s5 + $0xe0] sm:$0xff]
    %v1900 = vld [vmem:[%s5 + $0xe8] sm:$0xff]
    %v1901 = vld [vmem:[%s5 + $0xf0] sm:$0xff]
    %v1902 = vld [vmem:[%s5 + $0xf8] sm:$0xff]
    %v1903 = vld [vmem:[%s5 + $0x100] sm:$0xff]
    %v1904 = vld [vmem:[%s5 + $0x108] sm:$0xff]
    %v1905 = vld [vmem:[%s5 + $0x110] sm:$0xff]
    %v1906 = vld [vmem:[%s5 + $0x118] sm:$0xff]
    %v1907 = vld [vmem:[%s5 + $0x120] sm:$0xff]
    %v1908 = vld [vmem:[%s5 + $0x128] sm:$0xf]
    %v1909 = vld [vmem:[%s6] sm:$0x1]
    %v1911 = vlaneseq
    %v1912 = vshrl.u32 %v1911, 7
    %v1913 = vsub.s32 0, %v1912
    %v1914 = vrot.slane %v1909, %v1913
    %vm1916 = vcmask 359424
    %v1918 = vsel %vm1916, %v1870, 0
    %vm1920 = vcmask 1043456
    %v1922 = vsel %vm1920, %v1908, 0
    %1924 = vmatprep.subr.mxu0 0.0
    %1925 = vmatpush1.msra.mxu0 %v1871
    %1926 = vmatprep.subr.mxu0 0.0
    %1927 = vmatpush1.msra.mxu0 %v1872
    %1928 = vmatprep.subr.mxu0 0.0
    %1929 = vmatpush1.msra.mxu0 %v1873
    %1930 = vmatprep.subr.mxu0 0.0
    %1931 = vmatpush1.msra.mxu0 %v1874
    %1932 = vmatprep.subr.mxu0 0.0
    %1933 = vmatpush1.msra.mxu0 %v1875
    %1934 = vmatprep.subr.mxu0 0.0
    %1935 = vmatpush1.msra.mxu0 %v1876
    %1936 = vmatprep.subr.mxu0 0.0
    %1937 = vmatpush1.msra.mxu0 %v1877
    %1938 = vmatprep.subr.mxu0 0.0
    %1939 = vmatpush1.msra.mxu0 %v1878
    %1940 = vmatprep.subr.mxu0 0.0
    %1941 = vmatpush1.msra.mxu0 %v1879
    %1942 = vmatprep.subr.mxu0 0.0
    %1943 = vmatpush1.msra.mxu0 %v1880
    %1944 = vmatprep.subr.mxu0 0.0
    %1945 = vmatpush1.msra.mxu0 %v1881
    %1946 = vmatprep.subr.mxu0 0.0
    %1947 = vmatpush1.msra.mxu0 %v1882
    %1948 = vmatprep.subr.mxu0 0.0
    %1949 = vmatpush1.msra.mxu0 %v1883
    %1950 = vmatprep.subr.mxu0 0.0
    %1951 = vmatpush1.msra.mxu0 %v1884
    %1952 = vmatprep.subr.mxu0 0.0
    %1953 = vmatpush1.msra.mxu0 %v1885
    %1954 = vmatprep.subr.mxu0 0.0
    %1955 = vmatpush1.msra.mxu0 %v1886
    %1956 = vmatprep.subr.mxu0 0.0
    %1957 = vmatpush1.msra.mxu0 %v1887
    %1958 = vmatprep.subr.mxu0 0.0
    %1959 = vmatpush1.msra.mxu0 %v1888
    %1960 = vmatprep.subr.mxu0 0.0
    %1961 = vmatpush1.msra.mxu0 %v1889
    %1962 = vmatprep.subr.mxu0 0.0
    %1963 = vmatpush1.msra.mxu0 %v1890
    %1964 = vmatprep.subr.mxu0 0.0
    %1965 = vmatpush1.msra.mxu0 %v1891
    %1966 = vmatprep.subr.mxu0 0.0
    %1967 = vmatpush1.msra.mxu0 %v1892
    %1968 = vmatprep.subr.mxu0 0.0
    %1969 = vmatpush1.msra.mxu0 %v1893
    %1970 = vmatprep.subr.mxu0 0.0
    %1971 = vmatpush1.msra.mxu0 %v1894
    %1972 = vmatprep.subr.mxu0 0.0
    %1973 = vmatpush1.msra.mxu0 %v1895
    %1974 = vmatprep.subr.mxu0 0.0
    %1975 = vmatpush1.msra.mxu0 %v1896
    %1976 = vmatprep.subr.mxu0 0.0
    %1977 = vmatpush1.msra.mxu0 %v1897
    %1978 = vmatprep.subr.mxu0 0.0
    %1979 = vmatpush1.msra.mxu0 %v1898
    %1980 = vmatprep.subr.mxu0 0.0
    %1981 = vmatpush1.msra.mxu0 %v1899
    %1982 = vmatprep.subr.mxu0 0.0
    %1983 = vmatpush1.msra.mxu0 %v1900
    %1984 = vmatprep.subr.mxu0 0.0
    %1985 = vmatpush1.msra.mxu0 %v1901
    %1986 = vmatprep.subr.mxu0 0.0
    %1987 = vmatpush1.msra.mxu0 %v1902
    %1988 = vmatprep.mubr.f32.mxu0 %v1869
    %1989 = vmatmul.mubr.f32.gmra.mrb[0].mxu0 %v1868
    %v1990 = vpop.f32.mrb[0].mxu0
    %v1991 = vadd.f32 %v1914, %v1990
    %v1992 = vpop.f32.mrb[0].mxu0
    %1993 = vdwg.mxu0
    %1994 = vmatprep.subr.mxu0 0.0
    %1995 = vmatpush1.msra.mxu0 %v1903
    %1996 = vmatprep.subr.mxu0 0.0
    %1997 = vmatpush1.msra.mxu0 %v1904
    %1998 = vmatprep.subr.mxu0 0.0
    %1999 = vmatpush1.msra.mxu0 %v1905
    %2000 = vmatprep.subr.mxu0 0.0
    %2001 = vmatpush1.msra.mxu0 %v1906
    %2002 = vmatprep.subr.mxu0 0.0
    %2003 = vmatpush1.msra.mxu0 %v1907
    %2004 = vmatprep.subr.mxu0 0.0
    %2005 = vmatpush1.msra.mxu0 %v1922
    %2006 = vmatprep.subr.mxu0 0.0
    %2007 = vmatpush1.msra.mxu0 0.0
    %2008 = vmatprep.subr.mxu0 0.0
    %2009 = vmatpush1.msra.mxu0 0.0
    %2010 = vmatprep.subr.mxu0 0.0
    %2011 = vmatpush1.msra.mxu0 0.0
    %2012 = vmatprep.subr.mxu0 0.0
    %2013 = vmatpush1.msra.mxu0 0.0
    %2014 = vmatprep.subr.mxu0 0.0
    %2015 = vmatpush1.msra.mxu0 0.0
    %2016 = vmatprep.subr.mxu0 0.0
    %2017 = vmatpush1.msra.mxu0 0.0
    %2018 = vmatprep.subr.mxu0 0.0
    %2019 = vmatpush1.msra.mxu0 0.0
    %2020 = vmatprep.subr.mxu0 0.0
    %2021 = vmatpush1.msra.mxu0 0.0
    %2022 = vmatprep.subr.mxu0 0.0
    %2023 = vmatpush1.msra.mxu0 0.0
    %2024 = vmatprep.subr.mxu0 0.0
    %2025 = vmatpush1.msra.mxu0 0.0
    %2026 = vmatprep.subr.mxu0 0.0
    %2027 = vmatpush1.msra.mxu0 0.0
    %2028 = vmatprep.subr.mxu0 0.0
    %2029 = vmatpush1.msra.mxu0 0.0
    %2030 = vmatprep.subr.mxu0 0.0
    %2031 = vmatpush1.msra.mxu0 0.0
    %2032 = vmatprep.subr.mxu0 0.0
    %2033 = vmatpush1.msra.mxu0 0.0
    %2034 = vmatprep.subr.mxu0 0.0
    %2035 = vmatpush1.msra.mxu0 0.0
    %2036 = vmatprep.subr.mxu0 0.0
    %2037 = vmatpush1.msra.mxu0 0.0
    %2038 = vmatprep.subr.mxu0 0.0
    %2039 = vmatpush1.msra.mxu0 0.0
    %2040 = vmatprep.subr.mxu0 0.0
    %2041 = vmatpush1.msra.mxu0 0.0
    %2042 = vmatprep.subr.mxu0 0.0
    %2043 = vmatpush1.msra.mxu0 0.0
    %2044 = vmatprep.subr.mxu0 0.0
    %2045 = vmatpush1.msra.mxu0 0.0
    %2046 = vmatprep.subr.mxu0 0.0
    %2047 = vmatpush1.msra.mxu0 0.0
    %2048 = vmatprep.subr.mxu0 0.0
    %2049 = vmatpush1.msra.mxu0 0.0
    %2050 = vmatprep.subr.mxu0 0.0
    %2051 = vmatpush1.msra.mxu0 0.0
    %2052 = vmatprep.subr.mxu0 0.0
    %2053 = vmatpush1.msra.mxu0 0.0
    %2054 = vmatprep.subr.mxu0 0.0
    %2055 = vmatpush1.msra.mxu0 0.0
    %2056 = vmatprep.subr.mxu0 0.0
    %2057 = vmatpush1.msra.mxu0 0.0
    %2058 = vmatprep.mubr.f32.mxu0 0.0
    %2059 = vmatmul.mubr.f32.gmra.mrb[0].mxu0 %v1918
    %v2060 = vpop.f32.mrb[0].mxu0
    %v2061 = vadd.f32 %v1991, %v2060
    %v2062 = vpop.f32.mrb[0].mxu0
    %2063 = vdwg.mxu0
    %vm2064 = vcmask 39936
    %v2065 = vsel %vm2064, %v2061, -inf
    %2066 = vmax.xlane.f32.xlu0 %v2065
    %v2067 = vpop.xlane.xlu0 %2066
    %v2068 = vsub.f32 %v2061, %v2067
    %v2069 = vmul.f32 %v2068, 1.442695
    %v2070 = vpow.pop %v2069
    %v2071 = vsel %vm2064, %v2070, 0.0
    %2072 = vadd.xlane.f32.xlu0 %v2071
    %v2073 = vpop.xlane.xlu0 %2072
    %v2074 = vrcp.pop %v2073
    %v2075 = vmul.f32 %v2070, %v2074
    %2076 = vst.msk [vmem:[#allocation2] sm:$0xff] %vm2064, %v2075
    // Predicated region
    $region30: #{tpu_custom_call.1} parent=1 // pred_check
      _
    $region31: #{tpu_custom_call.1} parent=1 // pred_check_branch
      %2078 = sbr.rel (0) target = $region33
    $region32: #{tpu_custom_call.1} parent=1 // pred_region
      %s2080 = ssub.s32 128, 64
      %2081 = vsyncadd [#allocation3], %s2080
      %s2082 = sshll.u32 [#allocation2], 4
      %s2083 = int_to_ptr.vmem [resolvable:$true] %s2082
      %2088 = dma.vmem_to_hbm [thread:$0]  %s2083, 64, %s7, [#allocation3], 64, 64, 4
    $region33: #{tpu_custom_call.1} parent=1 // pred_fallthru
      _
    // Predicated region
    $region34: #{tpu_custom_call.1} parent=1 // pred_check
      _
    $region35: #{tpu_custom_call.1} parent=1 // pred_check_branch
      %2090 = sbr.rel (0) target = $region37
    $region36: #{tpu_custom_call.1} parent=1 // pred_region
      %2091 = dma.done [#allocation3], 128
    $region37: #{tpu_custom_call.1} parent=1 // pred_fallthru
      _
    %2092 = vsyncpa [#allocation3], 1

</llo_original>
